<compile_context>
chip_gen: v6e
topology: v6e:2x2x1
jax: 0.10.0
libtpu: 0.0.40
codegen_flags: <defaults>
</compile_context>

<pallas_src>
import functools

import jax
import jax.numpy as jnp
from jax.experimental import pallas as pl
from jax.experimental.pallas import tpu as pltpu

IN_FEATURES = 32 * 32 * 3   # 3072
OUT_FEATURES = 10


def _cdiv(a, b):
    return (a + b - 1) // b


def _round_up(a, m):
    return _cdiv(a, m) * m


@functools.lru_cache(maxsize=1)
def _vmem_capacity_bytes():
    """Physical VMEM per TensorCore; defensive fallbacks if the query fails."""
    try:
        return int(pltpu.get_tpu_info().vmem_capacity_bytes)
    except Exception:
        pass
    try:
        kind = jax.devices()[0].device_kind.lower()
        if "v7" in kind:
            return 64 << 20
    except Exception:
        pass
    return 128 << 20  # v5e / v6e


def _pick_tiling(batch, granule):
    """Pick (tm, vmem_limit_bytes) for this chip generation and batch size."""
    vmem_cap = _vmem_capacity_bytes()
    if vmem_cap <= (64 << 20):
        # v7x-class: 64 MiB physical VMEM per TC.  tm=1024 f32 keeps the
        # 2x12 MiB x buffers + weight/output well under a 48 MiB scoped limit.
        tm_max, vmem_limit = 1024, 48 << 20
    else:
        # v5e / v6e: 128 MiB physical VMEM.  Raise the scoped limit so tm=1024
        # (24 MiB of double-buffered activations) compiles comfortably.
        tm_max, vmem_limit = 1024, 64 << 20

    n_steps = max(1, _cdiv(batch, tm_max))
    if batch >= 2 * granule:
        # At least 2 (and an even number of) roughly-equal steps so the
        # "parallel" batch axis splits evenly across v7x's two TensorCores
        # (avoids e.g. one 512-row step + one 8-row step for B=520).
        n_steps = _round_up(max(n_steps, 2), 2)
    tm = min(tm_max, _round_up(_cdiv(batch, n_steps), granule))
    return tm, vmem_limit


def _lazynet_kernel(x_ref, w_ref, b_ref, o_ref):
    """One grid step = one batch tile.

    x_ref: (tm, 3072)  activation tile (f32 or bf16)
    w_ref: (3072, 10)  full weight, resident across the grid
    b_ref: (1, 10)     bias (f32), resident
    o_ref: (tm, 10)    output tile (f32)
    """
    acc = jnp.dot(x_ref[...], w_ref[...], preferred_element_type=jnp.float32)
    o_ref[...] = jnp.maximum(acc + b_ref[...], 0.0).astype(o_ref.dtype)


@functools.partial(jax.jit,
                   static_argnames=("tm", "vmem_limit_bytes", "stream_bf16"))
def _lazynet_pallas(x_nchw, w, b, *, tm, vmem_limit_bytes, stream_bf16):
    # Flatten exactly like torch's x.view(-1, 3072) (row-major over C, H, W).
    x = x_nchw.reshape(-1, IN_FEATURES)
    batch = x.shape[0]

    stream_dtype = jnp.bfloat16 if stream_bf16 else x.dtype
    xs = x.astype(stream_dtype)
    ws = w.astype(stream_dtype)
    b2 = b.reshape(1, OUT_FEATURES).astype(jnp.float32)

    grid = (_cdiv(batch, tm),)

    itemsize = 2 if stream_bf16 else 4
    cost = pl.CostEstimate(
        flops=2 * batch * IN_FEATURES * OUT_FEATURES,
        bytes_accessed=(batch * IN_FEATURES * itemsize
                        + IN_FEATURES * OUT_FEATURES * itemsize
                        + batch * OUT_FEATURES * 4),
        transcendentals=0,
    )

    return pl.pallas_call(
        _lazynet_kernel,
        out_shape=jax.ShapeDtypeStruct((batch, OUT_FEATURES), jnp.float32),
        grid=grid,
        in_specs=[
            pl.BlockSpec((tm, IN_FEATURES), lambda i: (i, 0)),            # activations
            pl.BlockSpec((IN_FEATURES, OUT_FEATURES), lambda i: (0, 0)),  # whole weight (resident)
            pl.BlockSpec((1, OUT_FEATURES), lambda i: (0, 0)),            # bias (resident)
        ],
        out_specs=pl.BlockSpec((tm, OUT_FEATURES), lambda i: (i, 0)),
        compiler_params=pltpu.CompilerParams(
            dimension_semantics=("parallel",),
            vmem_limit_bytes=vmem_limit_bytes,
        ),
        cost_estimate=cost,
    )(xs, ws, b2)


def lazynet_forward(x_nchw, w, b, *, stream_bf16=False):
    """LazyNet forward.

    x_nchw: (B, 3, 32, 32) f32; w: (3072, 10) f32 (== torch weight.T);
    b: (10,) f32.  stream_bf16=True streams x/w as bf16 (f32 accumulation).
    """
    total = 1
    for d in x_nchw.shape:
        total *= int(d)
    batch = total // IN_FEATURES

    # bf16 packs 2 rows per sublane -> keep the batch tile a multiple of 16.
    granule = 16 if stream_bf16 else 8
    tm, vmem_limit = _pick_tiling(batch, granule)
    return _lazynet_pallas(x_nchw, w, b, tm=tm,
                           vmem_limit_bytes=vmem_limit,
                           stream_bf16=stream_bf16)


def _reference(x_nchw, w, b):
    x = x_nchw.reshape(-1, IN_FEATURES)
    return jnp.maximum(x @ w + b, 0.0)


if __name__ == "__main__":
    key = jax.random.PRNGKey(0)
    kx, kw, kb, kx2 = jax.random.split(key, 4)

    # Deterministic parameter init (mimics nn.Linear's uniform(-1/sqrt(fan_in), ..)).
    bound = 1.0 / (IN_FEATURES ** 0.5)
    # Stored as (in_features, out_features) == torch weight.T
    w = jax.random.uniform(kw, (IN_FEATURES, OUT_FEATURES), jnp.float32,
                           minval=-bound, maxval=bound)
    b = jax.random.uniform(kb, (OUT_FEATURES,), jnp.float32,
                           minval=-bound, maxval=bound)

    # Small CIFAR-like batch: (B=2, C=3, H=32, W=32).  H/W must be 32 since the
    # Linear layer hard-codes 32*32*3 input features.  B=2 exercises the
    # unpadded ragged path (no jnp.pad, masked boundary stores).
    x = jax.random.normal(kx, (2, 3, 32, 32), jnp.float32)
    out = jax.block_until_ready(lazynet_forward(x, w, b))
    ref = _reference(x, w, b)
    assert out.shape == (2, OUT_FEATURES), out.shape
    assert jnp.allclose(out, ref, atol=1e-4, rtol=1e-4), \
        float(jnp.max(jnp.abs(out - ref)))

    # Larger ragged batch: exercises the balanced multi-step grid
    # (B=520 -> 2 tiles of 264/256 rather than 512 + 8).
    x_big = jax.random.normal(kx2, (520, 3, 32, 32), jnp.float32)
    out_big = jax.block_until_ready(lazynet_forward(x_big, w, b))
    ref_big = _reference(x_big, w, b)
    assert out_big.shape == (520, OUT_FEATURES), out_big.shape
    assert jnp.allclose(out_big, ref_big, atol=1e-4, rtol=1e-4), \
        float(jnp.max(jnp.abs(out_big - ref_big)))

    # Optional bf16 streaming path (bandwidth mode): looser tolerance vs the
    # fp32 reference because inputs are rounded to bf16 before the MXU.
    out_bf16 = jax.block_until_ready(lazynet_forward(x_big, w, b, stream_bf16=True))
    assert out_bf16.shape == (520, OUT_FEATURES), out_bf16.shape
    assert jnp.allclose(out_bf16, ref_big, atol=5e-2, rtol=5e-2), \
        float(jnp.max(jnp.abs(out_bf16 - ref_big)))

    print("KERNEL_OK")
</pallas_src>

<mosaic_0001>
module attributes {stable_mosaic.version = 11 : i64} {
  func.func @_lazynet_kernel(%arg0: i32, %arg1: memref<8x3072xf32, #tpu.memory_space<vmem>>, %arg2: memref<3072x10xf32, #tpu.memory_space<vmem>>, %arg3: memref<1x10xf32, #tpu.memory_space<vmem>>, %arg4: memref<8x10xf32, #tpu.memory_space<vmem>>) attributes {dimension_semantics = [#tpu.dimension_semantics<parallel>], iteration_bounds = array<i64: 1>, scalar_prefetch = 0 : i64, scratch_operands = 0 : i64, tpu.core_type = #tpu.core_type<tc>, window_params = [{transform_indices = @transform_0, window_bounds = array<i64: 8, 3072>}, {pipeline_mode = #tpu.pipeline_mode<synchronous>, transform_indices = @transform_1, window_bounds = array<i64: 3072, 10>}, {pipeline_mode = #tpu.pipeline_mode<synchronous>, transform_indices = @transform_2, window_bounds = array<i64: 1, 10>}, {transform_indices = @transform_3, window_bounds = array<i64: 8, 10>}]} {
    %c0 = arith.constant 0 : index
    %c0_0 = arith.constant 0 : index
    %0 = vector.load %arg1[%c0, %c0_0] : memref<8x3072xf32, #tpu.memory_space<vmem>>, vector<8x3072xf32>
    %c0_1 = arith.constant 0 : index
    %c0_2 = arith.constant 0 : index
    %1 = vector.load %arg2[%c0_1, %c0_2] : memref<3072x10xf32, #tpu.memory_space<vmem>>, vector<3072x10xf32>
    %cst = arith.constant dense<0.000000e+00> : vector<8x10xf32>
    %2 = tpu.matmul %0, %1, %cst {dimension_numbers = #tpu.dot_dimension_numbers<[1], [0], [0], [1], [0, 0, 1, 1], [], []>} : vector<8x3072xf32>, vector<3072x10xf32>, vector<8x10xf32> -> vector<8x10xf32>
    %c0_3 = arith.constant 0 : index
    %c0_4 = arith.constant 0 : index
    %3 = vector.load %arg3[%c0_3, %c0_4] : memref<1x10xf32, #tpu.memory_space<vmem>>, vector<1x10xf32>
    %4 = vector.broadcast %3 : vector<1x10xf32> to vector<8x10xf32>
    %5 = arith.addf %2, %4 : vector<8x10xf32>
    %cst_5 = arith.constant 0.000000e+00 : f32
    %6 = vector.broadcast %cst_5 : f32 to vector<8x10xf32>
    %7 = arith.maximumf %5, %6 : vector<8x10xf32>
    %c0_6 = arith.constant 0 : index
    %c0_7 = arith.constant 0 : index
    %8 = vector.load %arg4[%c0_6, %c0_7] : memref<8x10xf32, #tpu.memory_space<vmem>>, vector<8x10xf32>
    tpu.vector_store %arg4[%c0_6, %c0_7], %7 {strides = array<i32>} : memref<8x10xf32, #tpu.memory_space<vmem>>, vector<8x10xf32>,
    return
  }
  func.func @transform_0(%arg0: i32) -> (i32, i32) {
    %c0_i32 = arith.constant 0 : i32
    %c0_i32_0 = arith.constant 0 : i32
    return %arg0, %c0_i32 : i32, i32
  }
  func.func @transform_1(%arg0: i32) -> (i32, i32) {
    %c0_i32 = arith.constant 0 : i32
    %c0_i32_0 = arith.constant 0 : i32
    %c0_i32_1 = arith.constant 0 : i32
    return %c0_i32, %c0_i32_0 : i32, i32
  }
  func.func @transform_2(%arg0: i32) -> (i32, i32) {
    %c0_i32 = arith.constant 0 : i32
    %c0_i32_0 = arith.constant 0 : i32
    %c0_i32_1 = arith.constant 0 : i32
    return %c0_i32, %c0_i32_0 : i32, i32
  }
  func.func @transform_3(%arg0: i32) -> (i32, i32) {
    %c0_i32 = arith.constant 0 : i32
    %c0_i32_0 = arith.constant 0 : i32
    return %arg0, %c0_i32 : i32, i32
  }
}

</mosaic_0001>

<llo_original>
// kernel: _lazynet_pallas.1
$region0: #{_lazynet_pallas.1}
  #allocation0 [shape = 'u32[]', space=smem, size = 0x4, offset = 0x4, fixed_abs, tag = 'smem constant byte address 0x4 - core index']
  #allocation1 [shape = 'u32[144,128]{1,0:T(1,128)}', space=vmem, size = 0x12000, scoped, tag = 'internal scratch']
  %s0 = inlined_call_operand.vmem [shape: f32[2,3072], index: 0, kind: input, shape index: {}]
  %s1 = inlined_call_operand.vmem [shape: f32[3072,10], index: 1, kind: input, shape index: {}]
  %s2 = inlined_call_operand.vmem [shape: f32[1,10], index: 2, kind: input, shape index: {}]
  %s3 = inlined_call_operand.hbm [shape: f32[2,10], index: 3, kind: output, shape index: {}]
  %s4 = sld [smem:[#allocation0]]
  $region22: #{_lazynet_pallas.1} parent=0
    _
  %s6 = ssub.s32 1, %s4
  %s7 = scalar_select 0, %s6, %s4
  $region1: #{_lazynet_pallas.1} parent=0
    #allocation2 [shape = 'u8[4096]{0}', space=vmem, size = 0x1000, scoped, tag = 'output window, operand 0, single buffered']
    #allocation3 [shape = 's32[1]{0}', space=sflag, size = 0x4, scoped, tag = 'scoped memory for _lazynet_pallas.1']
    %8 = vsyncpa [#allocation3], 0
    // Predicated region
    $region2: #{_lazynet_pallas.1} parent=1 // pred_check
      _
    $region3: #{_lazynet_pallas.1} parent=1 // pred_check_branch
      %10 = sbr.rel (0) target = $region5
    $region4: #{_lazynet_pallas.1} parent=1 // pred_region
      _
    $region5: #{_lazynet_pallas.1} parent=1 // pred_fallthru
      _
    // Predicated region
    $region6: #{_lazynet_pallas.1} parent=1 // pred_check
      _
    $region7: #{_lazynet_pallas.1} parent=1 // pred_check_branch
      %12 = sbr.rel (0) target = $region9
    $region8: #{_lazynet_pallas.1} parent=1 // pred_region
      _
    $region9: #{_lazynet_pallas.1} parent=1 // pred_fallthru
      _
    // Predicated region
    $region10: #{_lazynet_pallas.1} parent=1 // pred_check
      _
    $region11: #{_lazynet_pallas.1} parent=1 // pred_check_branch
      %14 = sbr.rel (0) target = $region13
    $region12: #{_lazynet_pallas.1} parent=1 // pred_region
      _
    $region13: #{_lazynet_pallas.1} parent=1 // pred_fallthru
      _
    %v15 = vld [vmem:[%s0] sm:$0xff]
    %v16 = vld [vmem:[%s0 + $0x8] sm:$0xff]
    %v17 = vld [vmem:[%s0 + $0x10] sm:$0xff]
    %v18 = vld [vmem:[%s0 + $0x18] sm:$0xff]
    %v19 = vld [vmem:[%s0 + $0x20] sm:$0xff]
    %v20 = vld [vmem:[%s0 + $0x28] sm:$0xff]
    %v21 = vld [vmem:[%s0 + $0x30] sm:$0xff]
    %v22 = vld [vmem:[%s0 + $0x38] sm:$0xff]
    %v23 = vld [vmem:[%s0 + $0x40] sm:$0xff]
    %v24 = vld [vmem:[%s0 + $0x48] sm:$0xff]
    %v25 = vld [vmem:[%s0 + $0x50] sm:$0xff]
    %v26 = vld [vmem:[%s0 + $0x58] sm:$0xff]
    %v27 = vld [vmem:[%s0 + $0x60] sm:$0xff]
    %v28 = vld [vmem:[%s0 + $0x68] sm:$0xff]
    %v29 = vld [vmem:[%s0 + $0x70] sm:$0xff]
    %v30 = vld [vmem:[%s0 + $0x78] sm:$0xff]
    %v31 = vld [vmem:[%s0 + $0x80] sm:$0xff]
    %v32 = vld [vmem:[%s0 + $0x88] sm:$0xff]
    %v33 = vld [vmem:[%s0 + $0x90] sm:$0xff]
    %v34 = vld [vmem:[%s0 + $0x98] sm:$0xff]
    %v35 = vld [vmem:[%s0 + $0xa0] sm:$0xff]
    %v36 = vld [vmem:[%s0 + $0xa8] sm:$0xff]
    %v37 = vld [vmem:[%s0 + $0xb0] sm:$0xff]
    %v38 = vld [vmem:[%s0 + $0xb8] sm:$0xff]
    %v39 = vld [vmem:[%s1] sm:$0xff]
    %v40 = vld [vmem:[%s1 + $0x8] sm:$0xff]
    %v41 = vld [vmem:[%s1 + $0x10] sm:$0xff]
    %v42 = vld [vmem:[%s1 + $0x18] sm:$0xff]
    %v43 = vld [vmem:[%s1 + $0x20] sm:$0xff]
    %v44 = vld [vmem:[%s1 + $0x28] sm:$0xff]
    %v45 = vld [vmem:[%s1 + $0x30] sm:$0xff]
    %v46 = vld [vmem:[%s1 + $0x38] sm:$0xff]
    %v47 = vld [vmem:[%s1 + $0x40] sm:$0xff]
    %v48 = vld [vmem:[%s1 + $0x48] sm:$0xff]
    %v49 = vld [vmem:[%s1 + $0x50] sm:$0xff]
    %v50 = vld [vmem:[%s1 + $0x58] sm:$0xff]
    %v51 = vld [vmem:[%s1 + $0x60] sm:$0xff]
    %v52 = vld [vmem:[%s1 + $0x68] sm:$0xff]
    %v53 = vld [vmem:[%s1 + $0x70] sm:$0xff]
    %v54 = vld [vmem:[%s1 + $0x78] sm:$0xff]
    %v55 = vld [vmem:[%s1 + $0x80] sm:$0xff]
    %v56 = vld [vmem:[%s1 + $0x88] sm:$0xff]
    %v57 = vld [vmem:[%s1 + $0x90] sm:$0xff]
    %v58 = vld [vmem:[%s1 + $0x98] sm:$0xff]
    %v59 = vld [vmem:[%s1 + $0xa0] sm:$0xff]
    %v60 = vld [vmem:[%s1 + $0xa8] sm:$0xff]
    %v61 = vld [vmem:[%s1 + $0xb0] sm:$0xff]
    %v62 = vld [vmem:[%s1 + $0xb8] sm:$0xff]
    %v63 = vld [vmem:[%s1 + $0xc0] sm:$0xff]
    %v64 = vld [vmem:[%s1 + $0xc8] sm:$0xff]
    %v65 = vld [vmem:[%s1 + $0xd0] sm:$0xff]
    %v66 = vld [vmem:[%s1 + $0xd8] sm:$0xff]
    %v67 = vld [vmem:[%s1 + $0xe0] sm:$0xff]
    %v68 = vld [vmem:[%s1 + $0xe8] sm:$0xff]
    %v69 = vld [vmem:[%s1 + $0xf0] sm:$0xff]
    %v70 = vld [vmem:[%s1 + $0xf8] sm:$0xff]
    %v71 = vld [vmem:[%s1 + $0x100] sm:$0xff]
    %v72 = vld [vmem:[%s1 + $0x108] sm:$0xff]
    %v73 = vld [vmem:[%s1 + $0x110] sm:$0xff]
    %v74 = vld [vmem:[%s1 + $0x118] sm:$0xff]
    %v75 = vld [vmem:[%s1 + $0x120] sm:$0xff]
    %v76 = vld [vmem:[%s1 + $0x128] sm:$0xff]
    %v77 = vld [vmem:[%s1 + $0x130] sm:$0xff]
    %v78 = vld [vmem:[%s1 + $0x138] sm:$0xff]
    %v79 = vld [vmem:[%s1 + $0x140] sm:$0xff]
    %v80 = vld [vmem:[%s1 + $0x148] sm:$0xff]
    %v81 = vld [vmem:[%s1 + $0x150] sm:$0xff]
    %v82 = vld [vmem:[%s1 + $0x158] sm:$0xff]
    %v83 = vld [vmem:[%s1 + $0x160] sm:$0xff]
    %v84 = vld [vmem:[%s1 + $0x168] sm:$0xff]
    %v85 = vld [vmem:[%s1 + $0x170] sm:$0xff]
    %v86 = vld [vmem:[%s1 + $0x178] sm:$0xff]
    %v87 = vld [vmem:[%s1 + $0x180] sm:$0xff]
    %v88 = vld [vmem:[%s1 + $0x188] sm:$0xff]
    %v89 = vld [vmem:[%s1 + $0x190] sm:$0xff]
    %v90 = vld [vmem:[%s1 + $0x198] sm:$0xff]
    %v91 = vld [vmem:[%s1 + $0x1a0] sm:$0xff]
    %v92 = vld [vmem:[%s1 + $0x1a8] sm:$0xff]
    %v93 = vld [vmem:[%s1 + $0x1b0] sm:$0xff]
    %v94 = vld [vmem:[%s1 + $0x1b8] sm:$0xff]
    %v95 = vld [vmem:[%s1 + $0x1c0] sm:$0xff]
    %v96 = vld [vmem:[%s1 + $0x1c8] sm:$0xff]
    %v97 = vld [vmem:[%s1 + $0x1d0] sm:$0xff]
    %v98 = vld [vmem:[%s1 + $0x1d8] sm:$0xff]
    %v99 = vld [vmem:[%s1 + $0x1e0] sm:$0xff]
    %v100 = vld [vmem:[%s1 + $0x1e8] sm:$0xff]
    %v101 = vld [vmem:[%s1 + $0x1f0] sm:$0xff]
    %v102 = vld [vmem:[%s1 + $0x1f8] sm:$0xff]
    %v103 = vld [vmem:[%s1 + $0x200] sm:$0xff]
    %v104 = vld [vmem:[%s1 + $0x208] sm:$0xff]
    %v105 = vld [vmem:[%s1 + $0x210] sm:$0xff]
    %v106 = vld [vmem:[%s1 + $0x218] sm:$0xff]
    %v107 = vld [vmem:[%s1 + $0x220] sm:$0xff]
    %v108 = vld [vmem:[%s1 + $0x228] sm:$0xff]
    %v109 = vld [vmem:[%s1 + $0x230] sm:$0xff]
    %v110 = vld [vmem:[%s1 + $0x238] sm:$0xff]
    %v111 = vld [vmem:[%s1 + $0x240] sm:$0xff]
    %v112 = vld [vmem:[%s1 + $0x248] sm:$0xff]
    %v113 = vld [vmem:[%s1 + $0x250] sm:$0xff]
    %v114 = vld [vmem:[%s1 + $0x258] sm:$0xff]
    %v115 = vld [vmem:[%s1 + $0x260] sm:$0xff]
    %v116 = vld [vmem:[%s1 + $0x268] sm:$0xff]
    %v117 = vld [vmem:[%s1 + $0x270] sm:$0xff]
    %v118 = vld [vmem:[%s1 + $0x278] sm:$0xff]
    %v119 = vld [vmem:[%s1 + $0x280] sm:$0xff]
    %v120 = vld [vmem:[%s1 + $0x288] sm:$0xff]
    %v121 = vld [vmem:[%s1 + $0x290] sm:$0xff]
    %v122 = vld [vmem:[%s1 + $0x298] sm:$0xff]
    %v123 = vld [vmem:[%s1 + $0x2a0] sm:$0xff]
    %v124 = vld [vmem:[%s1 + $0x2a8] sm:$0xff]
    %v125 = vld [vmem:[%s1 + $0x2b0] sm:$0xff]
    %v126 = vld [vmem:[%s1 + $0x2b8] sm:$0xff]
    %v127 = vld [vmem:[%s1 + $0x2c0] sm:$0xff]
    %v128 = vld [vmem:[%s1 + $0x2c8] sm:$0xff]
    %v129 = vld [vmem:[%s1 + $0x2d0] sm:$0xff]
    %v130 = vld [vmem:[%s1 + $0x2d8] sm:$0xff]
    %v131 = vld [vmem:[%s1 + $0x2e0] sm:$0xff]
    %v132 = vld [vmem:[%s1 + $0x2e8] sm:$0xff]
    %v133 = vld [vmem:[%s1 + $0x2f0] sm:$0xff]
    %v134 = vld [vmem:[%s1 + $0x2f8] sm:$0xff]
    %v135 = vld [vmem:[%s1 + $0x300] sm:$0xff]
    %v136 = vld [vmem:[%s1 + $0x308] sm:$0xff]
    %v137 = vld [vmem:[%s1 + $0x310] sm:$0xff]
    %v138 = vld [vmem:[%s1 + $0x318] sm:$0xff]
    %v139 = vld [vmem:[%s1 + $0x320] sm:$0xff]
    %v140 = vld [vmem:[%s1 + $0x328] sm:$0xff]
    %v141 = vld [vmem:[%s1 + $0x330] sm:$0xff]
    %v142 = vld [vmem:[%s1 + $0x338] sm:$0xff]
    %v143 = vld [vmem:[%s1 + $0x340] sm:$0xff]
    %v144 = vld [vmem:[%s1 + $0x348] sm:$0xff]
    %v145 = vld [vmem:[%s1 + $0x350] sm:$0xff]
    %v146 = vld [vmem:[%s1 + $0x358] sm:$0xff]
    %v147 = vld [vmem:[%s1 + $0x360] sm:$0xff]
    %v148 = vld [vmem:[%s1 + $0x368] sm:$0xff]
    %v149 = vld [vmem:[%s1 + $0x370] sm:$0xff]
    %v150 = vld [vmem:[%s1 + $0x378] sm:$0xff]
    %v151 = vld [vmem:[%s1 + $0x380] sm:$0xff]
    %v152 = vld [vmem:[%s1 + $0x388] sm:$0xff]
    %v153 = vld [vmem:[%s1 + $0x390] sm:$0xff]
    %v154 = vld [vmem:[%s1 + $0x398] sm:$0xff]
    %v155 = vld [vmem:[%s1 + $0x3a0] sm:$0xff]
    %v156 = vld [vmem:[%s1 + $0x3a8] sm:$0xff]
    %v157 = vld [vmem:[%s1 + $0x3b0] sm:$0xff]
    %v158 = vld [vmem:[%s1 + $0x3b8] sm:$0xff]
    %v159 = vld [vmem:[%s1 + $0x3c0] sm:$0xff]
    %v160 = vld [vmem:[%s1 + $0x3c8] sm:$0xff]
    %v161 = vld [vmem:[%s1 + $0x3d0] sm:$0xff]
    %v162 = vld [vmem:[%s1 + $0x3d8] sm:$0xff]
    %v163 = vld [vmem:[%s1 + $0x3e0] sm:$0xff]
    %v164 = vld [vmem:[%s1 + $0x3e8] sm:$0xff]
    %v165 = vld [vmem:[%s1 + $0x3f0] sm:$0xff]
    %v166 = vld [vmem:[%s1 + $0x3f8] sm:$0xff]
    %v167 = vld [vmem:[%s1 + $0x400] sm:$0xff]
    %v168 = vld [vmem:[%s1 + $0x408] sm:$0xff]
    %v169 = vld [vmem:[%s1 + $0x410] sm:$0xff]
    %v170 = vld [vmem:[%s1 + $0x418] sm:$0xff]
    %v171 = vld [vmem:[%s1 + $0x420] sm:$0xff]
    %v172 = vld [vmem:[%s1 + $0x428] sm:$0xff]
    %v173 = vld [vmem:[%s1 + $0x430] sm:$0xff]
    %v174 = vld [vmem:[%s1 + $0x438] sm:$0xff]
    %v175 = vld [vmem:[%s1 + $0x440] sm:$0xff]
    %v176 = vld [vmem:[%s1 + $0x448] sm:$0xff]
    %v177 = vld [vmem:[%s1 + $0x450] sm:$0xff]
    %v178 = vld [vmem:[%s1 + $0x458] sm:$0xff]
    %v179 = vld [vmem:[%s1 + $0x460] sm:$0xff]
    %v180 = vld [vmem:[%s1 + $0x468] sm:$0xff]
    %v181 = vld [vmem:[%s1 + $0x470] sm:$0xff]
    %v182 = vld [vmem:[%s1 + $0x478] sm:$0xff]
    %v183 = vld [vmem:[%s1 + $0x480] sm:$0xff]
    %v184 = vld [vmem:[%s1 + $0x488] sm:$0xff]
    %v185 = vld [vmem:[%s1 + $0x490] sm:$0xff]
    %v186 = vld [vmem:[%s1 + $0x498] sm:$0xff]
    %v187 = vld [vmem:[%s1 + $0x4a0] sm:$0xff]
    %v188 = vld [vmem:[%s1 + $0x4a8] sm:$0xff]
    %v189 = vld [vmem:[%s1 + $0x4b0] sm:$0xff]
    %v190 = vld [vmem:[%s1 + $0x4b8] sm:$0xff]
    %v191 = vld [vmem:[%s1 + $0x4c0] sm:$0xff]
    %v192 = vld [vmem:[%s1 + $0x4c8] sm:$0xff]
    %v193 = vld [vmem:[%s1 + $0x4d0] sm:$0xff]
    %v194 = vld [vmem:[%s1 + $0x4d8] sm:$0xff]
    %v195 = vld [vmem:[%s1 + $0x4e0] sm:$0xff]
    %v196 = vld [vmem:[%s1 + $0x4e8] sm:$0xff]
    %v197 = vld [vmem:[%s1 + $0x4f0] sm:$0xff]
    %v198 = vld [vmem:[%s1 + $0x4f8] sm:$0xff]
    %v199 = vld [vmem:[%s1 + $0x500] sm:$0xff]
    %v200 = vld [vmem:[%s1 + $0x508] sm:$0xff]
    %v201 = vld [vmem:[%s1 + $0x510] sm:$0xff]
    %v202 = vld [vmem:[%s1 + $0x518] sm:$0xff]
    %v203 = vld [vmem:[%s1 + $0x520] sm:$0xff]
    %v204 = vld [vmem:[%s1 + $0x528] sm:$0xff]
    %v205 = vld [vmem:[%s1 + $0x530] sm:$0xff]
    %v206 = vld [vmem:[%s1 + $0x538] sm:$0xff]
    %v207 = vld [vmem:[%s1 + $0x540] sm:$0xff]
    %v208 = vld [vmem:[%s1 + $0x548] sm:$0xff]
    %v209 = vld [vmem:[%s1 + $0x550] sm:$0xff]
    %v210 = vld [vmem:[%s1 + $0x558] sm:$0xff]
    %v211 = vld [vmem:[%s1 + $0x560] sm:$0xff]
    %v212 = vld [vmem:[%s1 + $0x568] sm:$0xff]
    %v213 = vld [vmem:[%s1 + $0x570] sm:$0xff]
    %v214 = vld [vmem:[%s1 + $0x578] sm:$0xff]
    %v215 = vld [vmem:[%s1 + $0x580] sm:$0xff]
    %v216 = vld [vmem:[%s1 + $0x588] sm:$0xff]
    %v217 = vld [vmem:[%s1 + $0x590] sm:$0xff]
    %v218 = vld [vmem:[%s1 + $0x598] sm:$0xff]
    %v219 = vld [vmem:[%s1 + $0x5a0] sm:$0xff]
    %v220 = vld [vmem:[%s1 + $0x5a8] sm:$0xff]
    %v221 = vld [vmem:[%s1 + $0x5b0] sm:$0xff]
    %v222 = vld [vmem:[%s1 + $0x5b8] sm:$0xff]
    %v223 = vld [vmem:[%s1 + $0x5c0] sm:$0xff]
    %v224 = vld [vmem:[%s1 + $0x5c8] sm:$0xff]
    %v225 = vld [vmem:[%s1 + $0x5d0] sm:$0xff]
    %v226 = vld [vmem:[%s1 + $0x5d8] sm:$0xff]
    %v227 = vld [vmem:[%s1 + $0x5e0] sm:$0xff]
    %v228 = vld [vmem:[%s1 + $0x5e8] sm:$0xff]
    %v229 = vld [vmem:[%s1 + $0x5f0] sm:$0xff]
    %v230 = vld [vmem:[%s1 + $0x5f8] sm:$0xff]
    %v231 = vld [vmem:[%s1 + $0x600] sm:$0xff]
    %v232 = vld [vmem:[%s1 + $0x608] sm:$0xff]
    %v233 = vld [vmem:[%s1 + $0x610] sm:$0xff]
    %v234 = vld [vmem:[%s1 + $0x618] sm:$0xff]
    %v235 = vld [vmem:[%s1 + $0x620] sm:$0xff]
    %v236 = vld [vmem:[%s1 + $0x628] sm:$0xff]
    %v237 = vld [vmem:[%s1 + $0x630] sm:$0xff]
    %v238 = vld [vmem:[%s1 + $0x638] sm:$0xff]
    %v239 = vld [vmem:[%s1 + $0x640] sm:$0xff]
    %v240 = vld [vmem:[%s1 + $0x648] sm:$0xff]
    %v241 = vld [vmem:[%s1 + $0x650] sm:$0xff]
    %v242 = vld [vmem:[%s1 + $0x658] sm:$0xff]
    %v243 = vld [vmem:[%s1 + $0x660] sm:$0xff]
    %v244 = vld [vmem:[%s1 + $0x668] sm:$0xff]
    %v245 = vld [vmem:[%s1 + $0x670] sm:$0xff]
    %v246 = vld [vmem:[%s1 + $0x678] sm:$0xff]
    %v247 = vld [vmem:[%s1 + $0x680] sm:$0xff]
    %v248 = vld [vmem:[%s1 + $0x688] sm:$0xff]
    %v249 = vld [vmem:[%s1 + $0x690] sm:$0xff]
    %v250 = vld [vmem:[%s1 + $0x698] sm:$0xff]
    %v251 = vld [vmem:[%s1 + $0x6a0] sm:$0xff]
    %v252 = vld [vmem:[%s1 + $0x6a8] sm:$0xff]
    %v253 = vld [vmem:[%s1 + $0x6b0] sm:$0xff]
    %v254 = vld [vmem:[%s1 + $0x6b8] sm:$0xff]
    %v255 = vld [vmem:[%s1 + $0x6c0] sm:$0xff]
    %v256 = vld [vmem:[%s1 + $0x6c8] sm:$0xff]
    %v257 = vld [vmem:[%s1 + $0x6d0] sm:$0xff]
    %v258 = vld [vmem:[%s1 + $0x6d8] sm:$0xff]
    %v259 = vld [vmem:[%s1 + $0x6e0] sm:$0xff]
    %v260 = vld [vmem:[%s1 + $0x6e8] sm:$0xff]
    %v261 = vld [vmem:[%s1 + $0x6f0] sm:$0xff]
    %v262 = vld [vmem:[%s1 + $0x6f8] sm:$0xff]
    %v263 = vld [vmem:[%s1 + $0x700] sm:$0xff]
    %v264 = vld [vmem:[%s1 + $0x708] sm:$0xff]
    %v265 = vld [vmem:[%s1 + $0x710] sm:$0xff]
    %v266 = vld [vmem:[%s1 + $0x718] sm:$0xff]
    %v267 = vld [vmem:[%s1 + $0x720] sm:$0xff]
    %v268 = vld [vmem:[%s1 + $0x728] sm:$0xff]
    %v269 = vld [vmem:[%s1 + $0x730] sm:$0xff]
    %v270 = vld [vmem:[%s1 + $0x738] sm:$0xff]
    %v271 = vld [vmem:[%s1 + $0x740] sm:$0xff]
    %v272 = vld [vmem:[%s1 + $0x748] sm:$0xff]
    %v273 = vld [vmem:[%s1 + $0x750] sm:$0xff]
    %v274 = vld [vmem:[%s1 + $0x758] sm:$0xff]
    %v275 = vld [vmem:[%s1 + $0x760] sm:$0xff]
    %v276 = vld [vmem:[%s1 + $0x768] sm:$0xff]
    %v277 = vld [vmem:[%s1 + $0x770] sm:$0xff]
    %v278 = vld [vmem:[%s1 + $0x778] sm:$0xff]
    %v279 = vld [vmem:[%s1 + $0x780] sm:$0xff]
    %v280 = vld [vmem:[%s1 + $0x788] sm:$0xff]
    %v281 = vld [vmem:[%s1 + $0x790] sm:$0xff]
    %v282 = vld [vmem:[%s1 + $0x798] sm:$0xff]
    %v283 = vld [vmem:[%s1 + $0x7a0] sm:$0xff]
    %v284 = vld [vmem:[%s1 + $0x7a8] sm:$0xff]
    %v285 = vld [vmem:[%s1 + $0x7b0] sm:$0xff]
    %v286 = vld [vmem:[%s1 + $0x7b8] sm:$0xff]
    %v287 = vld [vmem:[%s1 + $0x7c0] sm:$0xff]
    %v288 = vld [vmem:[%s1 + $0x7c8] sm:$0xff]
    %v289 = vld [vmem:[%s1 + $0x7d0] sm:$0xff]
    %v290 = vld [vmem:[%s1 + $0x7d8] sm:$0xff]
    %v291 = vld [vmem:[%s1 + $0x7e0] sm:$0xff]
    %v292 = vld [vmem:[%s1 + $0x7e8] sm:$0xff]
    %v293 = vld [vmem:[%s1 + $0x7f0] sm:$0xff]
    %v294 = vld [vmem:[%s1 + $0x7f8] sm:$0xff]
    %v295 = vld [vmem:[%s1 + $0x800] sm:$0xff]
    %v296 = vld [vmem:[%s1 + $0x808] sm:$0xff]
    %v297 = vld [vmem:[%s1 + $0x810] sm:$0xff]
    %v298 = vld [vmem:[%s1 + $0x818] sm:$0xff]
    %v299 = vld [vmem:[%s1 + $0x820] sm:$0xff]
    %v300 = vld [vmem:[%s1 + $0x828] sm:$0xff]
    %v301 = vld [vmem:[%s1 + $0x830] sm:$0xff]
    %v302 = vld [vmem:[%s1 + $0x838] sm:$0xff]
    %v303 = vld [vmem:[%s1 + $0x840] sm:$0xff]
    %v304 = vld [vmem:[%s1 + $0x848] sm:$0xff]
    %v305 = vld [vmem:[%s1 + $0x850] sm:$0xff]
    %v306 = vld [vmem:[%s1 + $0x858] sm:$0xff]
    %v307 = vld [vmem:[%s1 + $0x860] sm:$0xff]
    %v308 = vld [vmem:[%s1 + $0x868] sm:$0xff]
    %v309 = vld [vmem:[%s1 + $0x870] sm:$0xff]
    %v310 = vld [vmem:[%s1 + $0x878] sm:$0xff]
    %v311 = vld [vmem:[%s1 + $0x880] sm:$0xff]
    %v312 = vld [vmem:[%s1 + $0x888] sm:$0xff]
    %v313 = vld [vmem:[%s1 + $0x890] sm:$0xff]
    %v314 = vld [vmem:[%s1 + $0x898] sm:$0xff]
    %v315 = vld [vmem:[%s1 + $0x8a0] sm:$0xff]
    %v316 = vld [vmem:[%s1 + $0x8a8] sm:$0xff]
    %v317 = vld [vmem:[%s1 + $0x8b0] sm:$0xff]
    %v318 = vld [vmem:[%s1 + $0x8b8] sm:$0xff]
    %v319 = vld [vmem:[%s1 + $0x8c0] sm:$0xff]
    %v320 = vld [vmem:[%s1 + $0x8c8] sm:$0xff]
    %v321 = vld [vmem:[%s1 + $0x8d0] sm:$0xff]
    %v322 = vld [vmem:[%s1 + $0x8d8] sm:$0xff]
    %v323 = vld [vmem:[%s1 + $0x8e0] sm:$0xff]
    %v324 = vld [vmem:[%s1 + $0x8e8] sm:$0xff]
    %v325 = vld [vmem:[%s1 + $0x8f0] sm:$0xff]
    %v326 = vld [vmem:[%s1 + $0x8f8] sm:$0xff]
    %v327 = vld [vmem:[%s1 + $0x900] sm:$0xff]
    %v328 = vld [vmem:[%s1 + $0x908] sm:$0xff]
    %v329 = vld [vmem:[%s1 + $0x910] sm:$0xff]
    %v330 = vld [vmem:[%s1 + $0x918] sm:$0xff]
    %v331 = vld [vmem:[%s1 + $0x920] sm:$0xff]
    %v332 = vld [vmem:[%s1 + $0x928] sm:$0xff]
    %v333 = vld [vmem:[%s1 + $0x930] sm:$0xff]
    %v334 = vld [vmem:[%s1 + $0x938] sm:$0xff]
    %v335 = vld [vmem:[%s1 + $0x940] sm:$0xff]
    %v336 = vld [vmem:[%s1 + $0x948] sm:$0xff]
    %v337 = vld [vmem:[%s1 + $0x950] sm:$0xff]
    %v338 = vld [vmem:[%s1 + $0x958] sm:$0xff]
    %v339 = vld [vmem:[%s1 + $0x960] sm:$0xff]
    %v340 = vld [vmem:[%s1 + $0x968] sm:$0xff]
    %v341 = vld [vmem:[%s1 + $0x970] sm:$0xff]
    %v342 = vld [vmem:[%s1 + $0x978] sm:$0xff]
    %v343 = vld [vmem:[%s1 + $0x980] sm:$0xff]
    %v344 = vld [vmem:[%s1 + $0x988] sm:$0xff]
    %v345 = vld [vmem:[%s1 + $0x990] sm:$0xff]
    %v346 = vld [vmem:[%s1 + $0x998] sm:$0xff]
    %v347 = vld [vmem:[%s1 + $0x9a0] sm:$0xff]
    %v348 = vld [vmem:[%s1 + $0x9a8] sm:$0xff]
    %v349 = vld [vmem:[%s1 + $0x9b0] sm:$0xff]
    %v350 = vld [vmem:[%s1 + $0x9b8] sm:$0xff]
    %v351 = vld [vmem:[%s1 + $0x9c0] sm:$0xff]
    %v352 = vld [vmem:[%s1 + $0x9c8] sm:$0xff]
    %v353 = vld [vmem:[%s1 + $0x9d0] sm:$0xff]
    %v354 = vld [vmem:[%s1 + $0x9d8] sm:$0xff]
    %v355 = vld [vmem:[%s1 + $0x9e0] sm:$0xff]
    %v356 = vld [vmem:[%s1 + $0x9e8] sm:$0xff]
    %v357 = vld [vmem:[%s1 + $0x9f0] sm:$0xff]
    %v358 = vld [vmem:[%s1 + $0x9f8] sm:$0xff]
    %v359 = vld [vmem:[%s1 + $0xa00] sm:$0xff]
    %v360 = vld [vmem:[%s1 + $0xa08] sm:$0xff]
    %v361 = vld [vmem:[%s1 + $0xa10] sm:$0xff]
    %v362 = vld [vmem:[%s1 + $0xa18] sm:$0xff]
    %v363 = vld [vmem:[%s1 + $0xa20] sm:$0xff]
    %v364 = vld [vmem:[%s1 + $0xa28] sm:$0xff]
    %v365 = vld [vmem:[%s1 + $0xa30] sm:$0xff]
    %v366 = vld [vmem:[%s1 + $0xa38] sm:$0xff]
    %v367 = vld [vmem:[%s1 + $0xa40] sm:$0xff]
    %v368 = vld [vmem:[%s1 + $0xa48] sm:$0xff]
    %v369 = vld [vmem:[%s1 + $0xa50] sm:$0xff]
    %v370 = vld [vmem:[%s1 + $0xa58] sm:$0xff]
    %v371 = vld [vmem:[%s1 + $0xa60] sm:$0xff]
    %v372 = vld [vmem:[%s1 + $0xa68] sm:$0xff]
    %v373 = vld [vmem:[%s1 + $0xa70] sm:$0xff]
    %v374 = vld [vmem:[%s1 + $0xa78] sm:$0xff]
    %v375 = vld [vmem:[%s1 + $0xa80] sm:$0xff]
    %v376 = vld [vmem:[%s1 + $0xa88] sm:$0xff]
    %v377 = vld [vmem:[%s1 + $0xa90] sm:$0xff]
    %v378 = vld [vmem:[%s1 + $0xa98] sm:$0xff]
    %v379 = vld [vmem:[%s1 + $0xaa0] sm:$0xff]
    %v380 = vld [vmem:[%s1 + $0xaa8] sm:$0xff]
    %v381 = vld [vmem:[%s1 + $0xab0] sm:$0xff]
    %v382 = vld [vmem:[%s1 + $0xab8] sm:$0xff]
    %v383 = vld [vmem:[%s1 + $0xac0] sm:$0xff]
    %v384 = vld [vmem:[%s1 + $0xac8] sm:$0xff]
    %v385 = vld [vmem:[%s1 + $0xad0] sm:$0xff]
    %v386 = vld [vmem:[%s1 + $0xad8] sm:$0xff]
    %v387 = vld [vmem:[%s1 + $0xae0] sm:$0xff]
    %v388 = vld [vmem:[%s1 + $0xae8] sm:$0xff]
    %v389 = vld [vmem:[%s1 + $0xaf0] sm:$0xff]
    %v390 = vld [vmem:[%s1 + $0xaf8] sm:$0xff]
    %v391 = vld [vmem:[%s1 + $0xb00] sm:$0xff]
    %v392 = vld [vmem:[%s1 + $0xb08] sm:$0xff]
    %v393 = vld [vmem:[%s1 + $0xb10] sm:$0xff]
    %v394 = vld [vmem:[%s1 + $0xb18] sm:$0xff]
    %v395 = vld [vmem:[%s1 + $0xb20] sm:$0xff]
    %v396 = vld [vmem:[%s1 + $0xb28] sm:$0xff]
    %v397 = vld [vmem:[%s1 + $0xb30] sm:$0xff]
    %v398 = vld [vmem:[%s1 + $0xb38] sm:$0xff]
    %v399 = vld [vmem:[%s1 + $0xb40] sm:$0xff]
    %v400 = vld [vmem:[%s1 + $0xb48] sm:$0xff]
    %v401 = vld [vmem:[%s1 + $0xb50] sm:$0xff]
    %v402 = vld [vmem:[%s1 + $0xb58] sm:$0xff]
    %v403 = vld [vmem:[%s1 + $0xb60] sm:$0xff]
    %v404 = vld [vmem:[%s1 + $0xb68] sm:$0xff]
    %v405 = vld [vmem:[%s1 + $0xb70] sm:$0xff]
    %v406 = vld [vmem:[%s1 + $0xb78] sm:$0xff]
    %v407 = vld [vmem:[%s1 + $0xb80] sm:$0xff]
    %v408 = vld [vmem:[%s1 + $0xb88] sm:$0xff]
    %v409 = vld [vmem:[%s1 + $0xb90] sm:$0xff]
    %v410 = vld [vmem:[%s1 + $0xb98] sm:$0xff]
    %v411 = vld [vmem:[%s1 + $0xba0] sm:$0xff]
    %v412 = vld [vmem:[%s1 + $0xba8] sm:$0xff]
    %v413 = vld [vmem:[%s1 + $0xbb0] sm:$0xff]
    %v414 = vld [vmem:[%s1 + $0xbb8] sm:$0xff]
    %v415 = vld [vmem:[%s1 + $0xbc0] sm:$0xff]
    %v416 = vld [vmem:[%s1 + $0xbc8] sm:$0xff]
    %v417 = vld [vmem:[%s1 + $0xbd0] sm:$0xff]
    %v418 = vld [vmem:[%s1 + $0xbd8] sm:$0xff]
    %v419 = vld [vmem:[%s1 + $0xbe0] sm:$0xff]
    %v420 = vld [vmem:[%s1 + $0xbe8] sm:$0xff]
    %v421 = vld [vmem:[%s1 + $0xbf0] sm:$0xff]
    %v422 = vld [vmem:[%s1 + $0xbf8] sm:$0xff]
    %v423 = vld [vmem:[%s2] sm:$0x1]
    %v425 = vlaneseq
    %v426 = vshrl.u32 %v425, 7
    %v427 = vsub.s32 0, %v426
    %v428 = vrot.slane %v423, %v427
    %v454 = vcombine.low %v15, %v21
    %v455 = vcombine.high %v15, %v21
    %v456 = vcombine.low %v27, %v33
    %v457 = vcombine.high %v27, %v33
    %v459 = vunpack.c.l.s4 1983009808
    %v460 = vunpack.c.0.s8 %v459
    %v461 = vlaneseq
    %v462 = vshrl.u32 %v461, 7
    %v463 = vsub.s32 %v460, %v462
    %v464 = vrot.slane %v454, %v463
    %v466 = vunpack.c.l.s4 1983009808
    %v467 = vunpack.c.0.s8 %v466
    %v468 = vlaneseq
    %v469 = vshrl.u32 %v468, 7
    %v470 = vsub.s32 %v467, %v469
    %v471 = vrot.slane %v455, %v470
    %v473 = vunpack.c.l.s4 1983009808
    %v474 = vunpack.c.0.s8 %v473
    %v475 = vlaneseq
    %v476 = vshrl.u32 %v475, 7
    %v477 = vsub.s32 %v474, %v476
    %v478 = vrot.slane %v456, %v477
    %v480 = vunpack.c.l.s4 1983009808
    %v481 = vunpack.c.0.s8 %v480
    %v482 = vlaneseq
    %v483 = vshrl.u32 %v482, 7
    %v484 = vsub.s32 %v481, %v483
    %v485 = vrot.slane %v457, %v484
    %v486 = vcombine.low %v464, %v478
    %v487 = vcombine.high %v464, %v478
    %v488 = vcombine.low %v471, %v485
    %v489 = vcombine.high %v471, %v485
    %v490 = vcombine.low %v16, %v22
    %v491 = vcombine.high %v16, %v22
    %v492 = vcombine.low %v28, %v34
    %v493 = vcombine.high %v28, %v34
    %v495 = vunpack.c.l.s4 1983009808
    %v496 = vunpack.c.0.s8 %v495
    %v497 = vlaneseq
    %v498 = vshrl.u32 %v497, 7
    %v499 = vsub.s32 %v496, %v498
    %v500 = vrot.slane %v490, %v499
    %v502 = vunpack.c.l.s4 1983009808
    %v503 = vunpack.c.0.s8 %v502
    %v504 = vlaneseq
    %v505 = vshrl.u32 %v504, 7
    %v506 = vsub.s32 %v503, %v505
    %v507 = vrot.slane %v491, %v506
    %v509 = vunpack.c.l.s4 1983009808
    %v510 = vunpack.c.0.s8 %v509
    %v511 = vlaneseq
    %v512 = vshrl.u32 %v511, 7
    %v513 = vsub.s32 %v510, %v512
    %v514 = vrot.slane %v492, %v513
    %v516 = vunpack.c.l.s4 1983009808
    %v517 = vunpack.c.0.s8 %v516
    %v518 = vlaneseq
    %v519 = vshrl.u32 %v518, 7
    %v520 = vsub.s32 %v517, %v519
    %v521 = vrot.slane %v493, %v520
    %v522 = vcombine.low %v500, %v514
    %v523 = vcombine.high %v500, %v514
    %v524 = vcombine.low %v507, %v521
    %v525 = vcombine.high %v507, %v521
    %v526 = vcombine.low %v17, %v23
    %v527 = vcombine.high %v17, %v23
    %v528 = vcombine.low %v29, %v35
    %v529 = vcombine.high %v29, %v35
    %v531 = vunpack.c.l.s4 1983009808
    %v532 = vunpack.c.0.s8 %v531
    %v533 = vlaneseq
    %v534 = vshrl.u32 %v533, 7
    %v535 = vsub.s32 %v532, %v534
    %v536 = vrot.slane %v526, %v535
    %v538 = vunpack.c.l.s4 1983009808
    %v539 = vunpack.c.0.s8 %v538
    %v540 = vlaneseq
    %v541 = vshrl.u32 %v540, 7
    %v542 = vsub.s32 %v539, %v541
    %v543 = vrot.slane %v527, %v542
    %v545 = vunpack.c.l.s4 1983009808
    %v546 = vunpack.c.0.s8 %v545
    %v547 = vlaneseq
    %v548 = vshrl.u32 %v547, 7
    %v549 = vsub.s32 %v546, %v548
    %v550 = vrot.slane %v528, %v549
    %v552 = vunpack.c.l.s4 1983009808
    %v553 = vunpack.c.0.s8 %v552
    %v554 = vlaneseq
    %v555 = vshrl.u32 %v554, 7
    %v556 = vsub.s32 %v553, %v555
    %v557 = vrot.slane %v529, %v556
    %v558 = vcombine.low %v536, %v550
    %v559 = vcombine.high %v536, %v550
    %v560 = vcombine.low %v543, %v557
    %v561 = vcombine.high %v543, %v557
    %v562 = vcombine.low %v18, %v24
    %v563 = vcombine.high %v18, %v24
    %v564 = vcombine.low %v30, %v36
    %v565 = vcombine.high %v30, %v36
    %v567 = vunpack.c.l.s4 1983009808
    %v568 = vunpack.c.0.s8 %v567
    %v569 = vlaneseq
    %v570 = vshrl.u32 %v569, 7
    %v571 = vsub.s32 %v568, %v570
    %v572 = vrot.slane %v562, %v571
    %v574 = vunpack.c.l.s4 1983009808
    %v575 = vunpack.c.0.s8 %v574
    %v576 = vlaneseq
    %v577 = vshrl.u32 %v576, 7
    %v578 = vsub.s32 %v575, %v577
    %v579 = vrot.slane %v563, %v578
    %v581 = vunpack.c.l.s4 1983009808
    %v582 = vunpack.c.0.s8 %v581
    %v583 = vlaneseq
    %v584 = vshrl.u32 %v583, 7
    %v585 = vsub.s32 %v582, %v584
    %v586 = vrot.slane %v564, %v585
    %v588 = vunpack.c.l.s4 1983009808
    %v589 = vunpack.c.0.s8 %v588
    %v590 = vlaneseq
    %v591 = vshrl.u32 %v590, 7
    %v592 = vsub.s32 %v589, %v591
    %v593 = vrot.slane %v565, %v592
    %v594 = vcombine.low %v572, %v586
    %v595 = vcombine.high %v572, %v586
    %v596 = vcombine.low %v579, %v593
    %v597 = vcombine.high %v579, %v593
    %v598 = vcombine.low %v19, %v25
    %v599 = vcombine.high %v19, %v25
    %v600 = vcombine.low %v31, %v37
    %v601 = vcombine.high %v31, %v37
    %v603 = vunpack.c.l.s4 1983009808
    %v604 = vunpack.c.0.s8 %v603
    %v605 = vlaneseq
    %v606 = vshrl.u32 %v605, 7
    %v607 = vsub.s32 %v604, %v606
    %v608 = vrot.slane %v598, %v607
    %v610 = vunpack.c.l.s4 1983009808
    %v611 = vunpack.c.0.s8 %v610
    %v612 = vlaneseq
    %v613 = vshrl.u32 %v612, 7
    %v614 = vsub.s32 %v611, %v613
    %v615 = vrot.slane %v599, %v614
    %v617 = vunpack.c.l.s4 1983009808
    %v618 = vunpack.c.0.s8 %v617
    %v619 = vlaneseq
    %v620 = vshrl.u32 %v619, 7
    %v621 = vsub.s32 %v618, %v620
    %v622 = vrot.slane %v600, %v621
    %v624 = vunpack.c.l.s4 1983009808
    %v625 = vunpack.c.0.s8 %v624
    %v626 = vlaneseq
    %v627 = vshrl.u32 %v626, 7
    %v628 = vsub.s32 %v625, %v627
    %v629 = vrot.slane %v601, %v628
    %v630 = vcombine.low %v608, %v622
    %v631 = vcombine.high %v608, %v622
    %v632 = vcombine.low %v615, %v629
    %v633 = vcombine.high %v615, %v629
    %v634 = vcombine.low %v20, %v26
    %v635 = vcombine.high %v20, %v26
    %v636 = vcombine.low %v32, %v38
    %v637 = vcombine.high %v32, %v38
    %v639 = vunpack.c.l.s4 1983009808
    %v640 = vunpack.c.0.s8 %v639
    %v641 = vlaneseq
    %v642 = vshrl.u32 %v641, 7
    %v643 = vsub.s32 %v640, %v642
    %v644 = vrot.slane %v634, %v643
    %v646 = vunpack.c.l.s4 1983009808
    %v647 = vunpack.c.0.s8 %v646
    %v648 = vlaneseq
    %v649 = vshrl.u32 %v648, 7
    %v650 = vsub.s32 %v647, %v649
    %v651 = vrot.slane %v635, %v650
    %v653 = vunpack.c.l.s4 1983009808
    %v654 = vunpack.c.0.s8 %v653
    %v655 = vlaneseq
    %v656 = vshrl.u32 %v655, 7
    %v657 = vsub.s32 %v654, %v656
    %v658 = vrot.slane %v636, %v657
    %v660 = vunpack.c.l.s4 1983009808
    %v661 = vunpack.c.0.s8 %v660
    %v662 = vlaneseq
    %v663 = vshrl.u32 %v662, 7
    %v664 = vsub.s32 %v661, %v663
    %v665 = vrot.slane %v637, %v664
    %v666 = vcombine.low %v644, %v658
    %v667 = vcombine.high %v644, %v658
    %v668 = vcombine.low %v651, %v665
    %v669 = vcombine.high %v651, %v665
    %694 = vmatprep.subr.mxu0 0.0
    %695 = vmatpush1.msra.mxu0 %v54
    %696 = vmatprep.subr.mxu0 0.0
    %697 = vmatpush1.msra.mxu0 %v53
    %698 = vmatprep.subr.mxu0 0.0
    %699 = vmatpush1.msra.mxu0 %v52
    %700 = vmatprep.subr.mxu0 0.0
    %701 = vmatpush1.msra.mxu0 %v51
    %702 = vmatprep.subr.mxu0 0.0
    %703 = vmatpush1.msra.mxu0 %v50
    %704 = vmatprep.subr.mxu0 0.0
    %705 = vmatpush1.msra.mxu0 %v49
    %706 = vmatprep.subr.mxu0 0.0
    %707 = vmatpush1.msra.mxu0 %v48
    %708 = vmatprep.subr.mxu0 0.0
    %709 = vmatpush1.msra.mxu0 %v47
    %710 = vmatprep.subr.mxu0 0.0
    %711 = vmatpush1.msra.mxu0 %v46
    %712 = vmatprep.subr.mxu0 0.0
    %713 = vmatpush1.msra.mxu0 %v45
    %714 = vmatprep.subr.mxu0 0.0
    %715 = vmatpush1.msra.mxu0 %v44
    %716 = vmatprep.subr.mxu0 0.0
    %717 = vmatpush1.msra.mxu0 %v43
    %718 = vmatprep.subr.mxu0 0.0
    %719 = vmatpush1.msra.mxu0 %v42
    %720 = vmatprep.subr.mxu0 0.0
    %721 = vmatpush1.msra.mxu0 %v41
    %722 = vmatprep.subr.mxu0 0.0
    %723 = vmatpush1.msra.mxu0 %v40
    %724 = vmatprep.subr.mxu0 0.0
    %725 = vmatpush1.msra.mxu0 %v39
    %726 = vmatprep.subr.mxu0 0.0
    %727 = vmatpush2.msra.mxu0 %v70
    %728 = vmatprep.subr.mxu0 0.0
    %729 = vmatpush2.msra.mxu0 %v69
    %730 = vmatprep.subr.mxu0 0.0
    %731 = vmatpush2.msra.mxu0 %v68
    %732 = vmatprep.subr.mxu0 0.0
    %733 = vmatpush2.msra.mxu0 %v67
    %734 = vmatprep.subr.mxu0 0.0
    %735 = vmatpush2.msra.mxu0 %v66
    %736 = vmatprep.subr.mxu0 0.0
    %737 = vmatpush2.msra.mxu0 %v65
    %738 = vmatprep.subr.mxu0 0.0
    %739 = vmatpush2.msra.mxu0 %v64
    %740 = vmatprep.subr.mxu0 0.0
    %741 = vmatpush2.msra.mxu0 %v63
    %742 = vmatprep.subr.mxu0 0.0
    %743 = vmatpush2.msra.mxu0 %v62
    %744 = vmatprep.subr.mxu0 0.0
    %745 = vmatpush2.msra.mxu0 %v61
    %746 = vmatprep.subr.mxu0 0.0
    %747 = vmatpush2.msra.mxu0 %v60
    %748 = vmatprep.subr.mxu0 0.0
    %749 = vmatpush2.msra.mxu0 %v59
    %750 = vmatprep.subr.mxu0 0.0
    %751 = vmatpush2.msra.mxu0 %v58
    %752 = vmatprep.subr.mxu0 0.0
    %753 = vmatpush2.msra.mxu0 %v57
    %754 = vmatprep.subr.mxu0 0.0
    %755 = vmatpush2.msra.mxu0 %v56
    %756 = vmatprep.subr.mxu0 0.0
    %757 = vmatpush2.msra.mxu0 %v55
    %758 = vmatprep.mubr.f32.mxu0 %v487
    %759 = vmatmul.mubr.f32.gmra.mxu0 %v486
    %v760 = vpop.f32.mrf.mxu0
    %v761 = vadd.f32 %v428, %v760
    %v762 = vpop.f32.mrf.mxu0
    %763 = vdwg.mxu0
    %764 = vmatprep.subr.mxu0 0.0
    %765 = vmatpush1.msra.mxu0 %v86
    %766 = vmatprep.subr.mxu0 0.0
    %767 = vmatpush1.msra.mxu0 %v85
    %768 = vmatprep.subr.mxu0 0.0
    %769 = vmatpush1.msra.mxu0 %v84
    %770 = vmatprep.subr.mxu0 0.0
    %771 = vmatpush1.msra.mxu0 %v83
    %772 = vmatprep.subr.mxu0 0.0
    %773 = vmatpush1.msra.mxu0 %v82
    %774 = vmatprep.subr.mxu0 0.0
    %775 = vmatpush1.msra.mxu0 %v81
    %776 = vmatprep.subr.mxu0 0.0
    %777 = vmatpush1.msra.mxu0 %v80
    %778 = vmatprep.subr.mxu0 0.0
    %779 = vmatpush1.msra.mxu0 %v79
    %780 = vmatprep.subr.mxu0 0.0
    %781 = vmatpush1.msra.mxu0 %v78
    %782 = vmatprep.subr.mxu0 0.0
    %783 = vmatpush1.msra.mxu0 %v77
    %784 = vmatprep.subr.mxu0 0.0
    %785 = vmatpush1.msra.mxu0 %v76
    %786 = vmatprep.subr.mxu0 0.0
    %787 = vmatpush1.msra.mxu0 %v75
    %788 = vmatprep.subr.mxu0 0.0
    %789 = vmatpush1.msra.mxu0 %v74
    %790 = vmatprep.subr.mxu0 0.0
    %791 = vmatpush1.msra.mxu0 %v73
    %792 = vmatprep.subr.mxu0 0.0
    %793 = vmatpush1.msra.mxu0 %v72
    %794 = vmatprep.subr.mxu0 0.0
    %795 = vmatpush1.msra.mxu0 %v71
    %796 = vmatprep.subr.mxu0 0.0
    %797 = vmatpush2.msra.mxu0 %v102
    %798 = vmatprep.subr.mxu0 0.0
    %799 = vmatpush2.msra.mxu0 %v101
    %800 = vmatprep.subr.mxu0 0.0
    %801 = vmatpush2.msra.mxu0 %v100
    %802 = vmatprep.subr.mxu0 0.0
    %803 = vmatpush2.msra.mxu0 %v99
    %804 = vmatprep.subr.mxu0 0.0
    %805 = vmatpush2.msra.mxu0 %v98
    %806 = vmatprep.subr.mxu0 0.0
    %807 = vmatpush2.msra.mxu0 %v97
    %808 = vmatprep.subr.mxu0 0.0
    %809 = vmatpush2.msra.mxu0 %v96
    %810 = vmatprep.subr.mxu0 0.0
    %811 = vmatpush2.msra.mxu0 %v95
    %812 = vmatprep.subr.mxu0 0.0
    %813 = vmatpush2.msra.mxu0 %v94
    %814 = vmatprep.subr.mxu0 0.0
    %815 = vmatpush2.msra.mxu0 %v93
    %816 = vmatprep.subr.mxu0 0.0
    %817 = vmatpush2.msra.mxu0 %v92
    %818 = vmatprep.subr.mxu0 0.0
    %819 = vmatpush2.msra.mxu0 %v91
    %820 = vmatprep.subr.mxu0 0.0
    %821 = vmatpush2.msra.mxu0 %v90
    %822 = vmatprep.subr.mxu0 0.0
    %823 = vmatpush2.msra.mxu0 %v89
    %824 = vmatprep.subr.mxu0 0.0
    %825 = vmatpush2.msra.mxu0 %v88
    %826 = vmatprep.subr.mxu0 0.0
    %827 = vmatpush2.msra.mxu0 %v87
    %828 = vmatprep.mubr.f32.mxu0 %v489
    %829 = vmatmul.mubr.f32.gmra.mxu0 %v488
    %v830 = vpop.f32.mrf.mxu0
    %v831 = vadd.f32 %v761, %v830
    %v832 = vpop.f32.mrf.mxu0
    %833 = vdwg.mxu0
    %834 = vmatprep.subr.mxu0 0.0
    %835 = vmatpush1.msra.mxu0 %v118
    %836 = vmatprep.subr.mxu0 0.0
    %837 = vmatpush1.msra.mxu0 %v117
    %838 = vmatprep.subr.mxu0 0.0
    %839 = vmatpush1.msra.mxu0 %v116
    %840 = vmatprep.subr.mxu0 0.0
    %841 = vmatpush1.msra.mxu0 %v115
    %842 = vmatprep.subr.mxu0 0.0
    %843 = vmatpush1.msra.mxu0 %v114
    %844 = vmatprep.subr.mxu0 0.0
    %845 = vmatpush1.msra.mxu0 %v113
    %846 = vmatprep.subr.mxu0 0.0
    %847 = vmatpush1.msra.mxu0 %v112
    %848 = vmatprep.subr.mxu0 0.0
    %849 = vmatpush1.msra.mxu0 %v111
    %850 = vmatprep.subr.mxu0 0.0
    %851 = vmatpush1.msra.mxu0 %v110
    %852 = vmatprep.subr.mxu0 0.0
    %853 = vmatpush1.msra.mxu0 %v109
    %854 = vmatprep.subr.mxu0 0.0
    %855 = vmatpush1.msra.mxu0 %v108
    %856 = vmatprep.subr.mxu0 0.0
    %857 = vmatpush1.msra.mxu0 %v107
    %858 = vmatprep.subr.mxu0 0.0
    %859 = vmatpush1.msra.mxu0 %v106
    %860 = vmatprep.subr.mxu0 0.0
    %861 = vmatpush1.msra.mxu0 %v105
    %862 = vmatprep.subr.mxu0 0.0
    %863 = vmatpush1.msra.mxu0 %v104
    %864 = vmatprep.subr.mxu0 0.0
    %865 = vmatpush1.msra.mxu0 %v103
    %866 = vmatprep.subr.mxu0 0.0
    %867 = vmatpush2.msra.mxu0 %v134
    %868 = vmatprep.subr.mxu0 0.0
    %869 = vmatpush2.msra.mxu0 %v133
    %870 = vmatprep.subr.mxu0 0.0
    %871 = vmatpush2.msra.mxu0 %v132
    %872 = vmatprep.subr.mxu0 0.0
    %873 = vmatpush2.msra.mxu0 %v131
    %874 = vmatprep.subr.mxu0 0.0
    %875 = vmatpush2.msra.mxu0 %v130
    %876 = vmatprep.subr.mxu0 0.0
    %877 = vmatpush2.msra.mxu0 %v129
    %878 = vmatprep.subr.mxu0 0.0
    %879 = vmatpush2.msra.mxu0 %v128
    %880 = vmatprep.subr.mxu0 0.0
    %881 = vmatpush2.msra.mxu0 %v127
    %882 = vmatprep.subr.mxu0 0.0
    %883 = vmatpush2.msra.mxu0 %v126
    %884 = vmatprep.subr.mxu0 0.0
    %885 = vmatpush2.msra.mxu0 %v125
    %886 = vmatprep.subr.mxu0 0.0
    %887 = vmatpush2.msra.mxu0 %v124
    %888 = vmatprep.subr.mxu0 0.0
    %889 = vmatpush2.msra.mxu0 %v123
    %890 = vmatprep.subr.mxu0 0.0
    %891 = vmatpush2.msra.mxu0 %v122
    %892 = vmatprep.subr.mxu0 0.0
    %893 = vmatpush2.msra.mxu0 %v121
    %894 = vmatprep.subr.mxu0 0.0
    %895 = vmatpush2.msra.mxu0 %v120
    %896 = vmatprep.subr.mxu0 0.0
    %897 = vmatpush2.msra.mxu0 %v119
    %898 = vmatprep.mubr.f32.mxu0 %v523
    %899 = vmatmul.mubr.f32.gmra.mxu0 %v522
    %v900 = vpop.f32.mrf.mxu0
    %v901 = vadd.f32 %v831, %v900
    %v902 = vpop.f32.mrf.mxu0
    %903 = vdwg.mxu0
    %904 = vmatprep.subr.mxu0 0.0
    %905 = vmatpush1.msra.mxu0 %v150
    %906 = vmatprep.subr.mxu0 0.0
    %907 = vmatpush1.msra.mxu0 %v149
    %908 = vmatprep.subr.mxu0 0.0
    %909 = vmatpush1.msra.mxu0 %v148
    %910 = vmatprep.subr.mxu0 0.0
    %911 = vmatpush1.msra.mxu0 %v147
    %912 = vmatprep.subr.mxu0 0.0
    %913 = vmatpush1.msra.mxu0 %v146
    %914 = vmatprep.subr.mxu0 0.0
    %915 = vmatpush1.msra.mxu0 %v145
    %916 = vmatprep.subr.mxu0 0.0
    %917 = vmatpush1.msra.mxu0 %v144
    %918 = vmatprep.subr.mxu0 0.0
    %919 = vmatpush1.msra.mxu0 %v143
    %920 = vmatprep.subr.mxu0 0.0
    %921 = vmatpush1.msra.mxu0 %v142
    %922 = vmatprep.subr.mxu0 0.0
    %923 = vmatpush1.msra.mxu0 %v141
    %924 = vmatprep.subr.mxu0 0.0
    %925 = vmatpush1.msra.mxu0 %v140
    %926 = vmatprep.subr.mxu0 0.0
    %927 = vmatpush1.msra.mxu0 %v139
    %928 = vmatprep.subr.mxu0 0.0
    %929 = vmatpush1.msra.mxu0 %v138
    %930 = vmatprep.subr.mxu0 0.0
    %931 = vmatpush1.msra.mxu0 %v137
    %932 = vmatprep.subr.mxu0 0.0
    %933 = vmatpush1.msra.mxu0 %v136
    %934 = vmatprep.subr.mxu0 0.0
    %935 = vmatpush1.msra.mxu0 %v135
    %936 = vmatprep.subr.mxu0 0.0
    %937 = vmatpush2.msra.mxu0 %v166
    %938 = vmatprep.subr.mxu0 0.0
    %939 = vmatpush2.msra.mxu0 %v165
    %940 = vmatprep.subr.mxu0 0.0
    %941 = vmatpush2.msra.mxu0 %v164
    %942 = vmatprep.subr.mxu0 0.0
    %943 = vmatpush2.msra.mxu0 %v163
    %944 = vmatprep.subr.mxu0 0.0
    %945 = vmatpush2.msra.mxu0 %v162
    %946 = vmatprep.subr.mxu0 0.0
    %947 = vmatpush2.msra.mxu0 %v161
    %948 = vmatprep.subr.mxu0 0.0
    %949 = vmatpush2.msra.mxu0 %v160
    %950 = vmatprep.subr.mxu0 0.0
    %951 = vmatpush2.msra.mxu0 %v159
    %952 = vmatprep.subr.mxu0 0.0
    %953 = vmatpush2.msra.mxu0 %v158
    %954 = vmatprep.subr.mxu0 0.0
    %955 = vmatpush2.msra.mxu0 %v157
    %956 = vmatprep.subr.mxu0 0.0
    %957 = vmatpush2.msra.mxu0 %v156
    %958 = vmatprep.subr.mxu0 0.0
    %959 = vmatpush2.msra.mxu0 %v155
    %960 = vmatprep.subr.mxu0 0.0
    %961 = vmatpush2.msra.mxu0 %v154
    %962 = vmatprep.subr.mxu0 0.0
    %963 = vmatpush2.msra.mxu0 %v153
    %964 = vmatprep.subr.mxu0 0.0
    %965 = vmatpush2.msra.mxu0 %v152
    %966 = vmatprep.subr.mxu0 0.0
    %967 = vmatpush2.msra.mxu0 %v151
    %968 = vmatprep.mubr.f32.mxu0 %v525
    %969 = vmatmul.mubr.f32.gmra.mxu0 %v524
    %v970 = vpop.f32.mrf.mxu0
    %v971 = vadd.f32 %v901, %v970
    %v972 = vpop.f32.mrf.mxu0
    %973 = vdwg.mxu0
    %974 = vmatprep.subr.mxu0 0.0
    %975 = vmatpush1.msra.mxu0 %v182
    %976 = vmatprep.subr.mxu0 0.0
    %977 = vmatpush1.msra.mxu0 %v181
    %978 = vmatprep.subr.mxu0 0.0
    %979 = vmatpush1.msra.mxu0 %v180
    %980 = vmatprep.subr.mxu0 0.0
    %981 = vmatpush1.msra.mxu0 %v179
    %982 = vmatprep.subr.mxu0 0.0
    %983 = vmatpush1.msra.mxu0 %v178
    %984 = vmatprep.subr.mxu0 0.0
    %985 = vmatpush1.msra.mxu0 %v177
    %986 = vmatprep.subr.mxu0 0.0
    %987 = vmatpush1.msra.mxu0 %v176
    %988 = vmatprep.subr.mxu0 0.0
    %989 = vmatpush1.msra.mxu0 %v175
    %990 = vmatprep.subr.mxu0 0.0
    %991 = vmatpush1.msra.mxu0 %v174
    %992 = vmatprep.subr.mxu0 0.0
    %993 = vmatpush1.msra.mxu0 %v173
    %994 = vmatprep.subr.mxu0 0.0
    %995 = vmatpush1.msra.mxu0 %v172
    %996 = vmatprep.subr.mxu0 0.0
    %997 = vmatpush1.msra.mxu0 %v171
    %998 = vmatprep.subr.mxu0 0.0
    %999 = vmatpush1.msra.mxu0 %v170
    %1000 = vmatprep.subr.mxu0 0.0
    %1001 = vmatpush1.msra.mxu0 %v169
    %1002 = vmatprep.subr.mxu0 0.0
    %1003 = vmatpush1.msra.mxu0 %v168
    %1004 = vmatprep.subr.mxu0 0.0
    %1005 = vmatpush1.msra.mxu0 %v167
    %1006 = vmatprep.subr.mxu0 0.0
    %1007 = vmatpush2.msra.mxu0 %v198
    %1008 = vmatprep.subr.mxu0 0.0
    %1009 = vmatpush2.msra.mxu0 %v197
    %1010 = vmatprep.subr.mxu0 0.0
    %1011 = vmatpush2.msra.mxu0 %v196
    %1012 = vmatprep.subr.mxu0 0.0
    %1013 = vmatpush2.msra.mxu0 %v195
    %1014 = vmatprep.subr.mxu0 0.0
    %1015 = vmatpush2.msra.mxu0 %v194
    %1016 = vmatprep.subr.mxu0 0.0
    %1017 = vmatpush2.msra.mxu0 %v193
    %1018 = vmatprep.subr.mxu0 0.0
    %1019 = vmatpush2.msra.mxu0 %v192
    %1020 = vmatprep.subr.mxu0 0.0
    %1021 = vmatpush2.msra.mxu0 %v191
    %1022 = vmatprep.subr.mxu0 0.0
    %1023 = vmatpush2.msra.mxu0 %v190
    %1024 = vmatprep.subr.mxu0 0.0
    %1025 = vmatpush2.msra.mxu0 %v189
    %1026 = vmatprep.subr.mxu0 0.0
    %1027 = vmatpush2.msra.mxu0 %v188
    %1028 = vmatprep.subr.mxu0 0.0
    %1029 = vmatpush2.msra.mxu0 %v187
    %1030 = vmatprep.subr.mxu0 0.0
    %1031 = vmatpush2.msra.mxu0 %v186
    %1032 = vmatprep.subr.mxu0 0.0
    %1033 = vmatpush2.msra.mxu0 %v185
    %1034 = vmatprep.subr.mxu0 0.0
    %1035 = vmatpush2.msra.mxu0 %v184
    %1036 = vmatprep.subr.mxu0 0.0
    %1037 = vmatpush2.msra.mxu0 %v183
    %1038 = vmatprep.mubr.f32.mxu0 %v559
    %1039 = vmatmul.mubr.f32.gmra.mxu0 %v558
    %v1040 = vpop.f32.mrf.mxu0
    %v1041 = vadd.f32 %v971, %v1040
    %v1042 = vpop.f32.mrf.mxu0
    %1043 = vdwg.mxu0
    %1044 = vmatprep.subr.mxu0 0.0
    %1045 = vmatpush1.msra.mxu0 %v214
    %1046 = vmatprep.subr.mxu0 0.0
    %1047 = vmatpush1.msra.mxu0 %v213
    %1048 = vmatprep.subr.mxu0 0.0
    %1049 = vmatpush1.msra.mxu0 %v212
    %1050 = vmatprep.subr.mxu0 0.0
    %1051 = vmatpush1.msra.mxu0 %v211
    %1052 = vmatprep.subr.mxu0 0.0
    %1053 = vmatpush1.msra.mxu0 %v210
    %1054 = vmatprep.subr.mxu0 0.0
    %1055 = vmatpush1.msra.mxu0 %v209
    %1056 = vmatprep.subr.mxu0 0.0
    %1057 = vmatpush1.msra.mxu0 %v208
    %1058 = vmatprep.subr.mxu0 0.0
    %1059 = vmatpush1.msra.mxu0 %v207
    %1060 = vmatprep.subr.mxu0 0.0
    %1061 = vmatpush1.msra.mxu0 %v206
    %1062 = vmatprep.subr.mxu0 0.0
    %1063 = vmatpush1.msra.mxu0 %v205
    %1064 = vmatprep.subr.mxu0 0.0
    %1065 = vmatpush1.msra.mxu0 %v204
    %1066 = vmatprep.subr.mxu0 0.0
    %1067 = vmatpush1.msra.mxu0 %v203
    %1068 = vmatprep.subr.mxu0 0.0
    %1069 = vmatpush1.msra.mxu0 %v202
    %1070 = vmatprep.subr.mxu0 0.0
    %1071 = vmatpush1.msra.mxu0 %v201
    %1072 = vmatprep.subr.mxu0 0.0
    %1073 = vmatpush1.msra.mxu0 %v200
    %1074 = vmatprep.subr.mxu0 0.0
    %1075 = vmatpush1.msra.mxu0 %v199
    %1076 = vmatprep.subr.mxu0 0.0
    %1077 = vmatpush2.msra.mxu0 %v230
    %1078 = vmatprep.subr.mxu0 0.0
    %1079 = vmatpush2.msra.mxu0 %v229
    %1080 = vmatprep.subr.mxu0 0.0
    %1081 = vmatpush2.msra.mxu0 %v228
    %1082 = vmatprep.subr.mxu0 0.0
    %1083 = vmatpush2.msra.mxu0 %v227
    %1084 = vmatprep.subr.mxu0 0.0
    %1085 = vmatpush2.msra.mxu0 %v226
    %1086 = vmatprep.subr.mxu0 0.0
    %1087 = vmatpush2.msra.mxu0 %v225
    %1088 = vmatprep.subr.mxu0 0.0
    %1089 = vmatpush2.msra.mxu0 %v224
    %1090 = vmatprep.subr.mxu0 0.0
    %1091 = vmatpush2.msra.mxu0 %v223
    %1092 = vmatprep.subr.mxu0 0.0
    %1093 = vmatpush2.msra.mxu0 %v222
    %1094 = vmatprep.subr.mxu0 0.0
    %1095 = vmatpush2.msra.mxu0 %v221
    %1096 = vmatprep.subr.mxu0 0.0
    %1097 = vmatpush2.msra.mxu0 %v220
    %1098 = vmatprep.subr.mxu0 0.0
    %1099 = vmatpush2.msra.mxu0 %v219
    %1100 = vmatprep.subr.mxu0 0.0
    %1101 = vmatpush2.msra.mxu0 %v218
    %1102 = vmatprep.subr.mxu0 0.0
    %1103 = vmatpush2.msra.mxu0 %v217
    %1104 = vmatprep.subr.mxu0 0.0
    %1105 = vmatpush2.msra.mxu0 %v216
    %1106 = vmatprep.subr.mxu0 0.0
    %1107 = vmatpush2.msra.mxu0 %v215
    %1108 = vmatprep.mubr.f32.mxu0 %v561
    %1109 = vmatmul.mubr.f32.gmra.mxu0 %v560
    %v1110 = vpop.f32.mrf.mxu0
    %v1111 = vadd.f32 %v1041, %v1110
    %v1112 = vpop.f32.mrf.mxu0
    %1113 = vdwg.mxu0
    %1114 = vmatprep.subr.mxu0 0.0
    %1115 = vmatpush1.msra.mxu0 %v246
    %1116 = vmatprep.subr.mxu0 0.0
    %1117 = vmatpush1.msra.mxu0 %v245
    %1118 = vmatprep.subr.mxu0 0.0
    %1119 = vmatpush1.msra.mxu0 %v244
    %1120 = vmatprep.subr.mxu0 0.0
    %1121 = vmatpush1.msra.mxu0 %v243
    %1122 = vmatprep.subr.mxu0 0.0
    %1123 = vmatpush1.msra.mxu0 %v242
    %1124 = vmatprep.subr.mxu0 0.0
    %1125 = vmatpush1.msra.mxu0 %v241
    %1126 = vmatprep.subr.mxu0 0.0
    %1127 = vmatpush1.msra.mxu0 %v240
    %1128 = vmatprep.subr.mxu0 0.0
    %1129 = vmatpush1.msra.mxu0 %v239
    %1130 = vmatprep.subr.mxu0 0.0
    %1131 = vmatpush1.msra.mxu0 %v238
    %1132 = vmatprep.subr.mxu0 0.0
    %1133 = vmatpush1.msra.mxu0 %v237
    %1134 = vmatprep.subr.mxu0 0.0
    %1135 = vmatpush1.msra.mxu0 %v236
    %1136 = vmatprep.subr.mxu0 0.0
    %1137 = vmatpush1.msra.mxu0 %v235
    %1138 = vmatprep.subr.mxu0 0.0
    %1139 = vmatpush1.msra.mxu0 %v234
    %1140 = vmatprep.subr.mxu0 0.0
    %1141 = vmatpush1.msra.mxu0 %v233
    %1142 = vmatprep.subr.mxu0 0.0
    %1143 = vmatpush1.msra.mxu0 %v232
    %1144 = vmatprep.subr.mxu0 0.0
    %1145 = vmatpush1.msra.mxu0 %v231
    %1146 = vmatprep.subr.mxu0 0.0
    %1147 = vmatpush2.msra.mxu0 %v262
    %1148 = vmatprep.subr.mxu0 0.0
    %1149 = vmatpush2.msra.mxu0 %v261
    %1150 = vmatprep.subr.mxu0 0.0
    %1151 = vmatpush2.msra.mxu0 %v260
    %1152 = vmatprep.subr.mxu0 0.0
    %1153 = vmatpush2.msra.mxu0 %v259
    %1154 = vmatprep.subr.mxu0 0.0
    %1155 = vmatpush2.msra.mxu0 %v258
    %1156 = vmatprep.subr.mxu0 0.0
    %1157 = vmatpush2.msra.mxu0 %v257
    %1158 = vmatprep.subr.mxu0 0.0
    %1159 = vmatpush2.msra.mxu0 %v256
    %1160 = vmatprep.subr.mxu0 0.0
    %1161 = vmatpush2.msra.mxu0 %v255
    %1162 = vmatprep.subr.mxu0 0.0
    %1163 = vmatpush2.msra.mxu0 %v254
    %1164 = vmatprep.subr.mxu0 0.0
    %1165 = vmatpush2.msra.mxu0 %v253
    %1166 = vmatprep.subr.mxu0 0.0
    %1167 = vmatpush2.msra.mxu0 %v252
    %1168 = vmatprep.subr.mxu0 0.0
    %1169 = vmatpush2.msra.mxu0 %v251
    %1170 = vmatprep.subr.mxu0 0.0
    %1171 = vmatpush2.msra.mxu0 %v250
    %1172 = vmatprep.subr.mxu0 0.0
    %1173 = vmatpush2.msra.mxu0 %v249
    %1174 = vmatprep.subr.mxu0 0.0
    %1175 = vmatpush2.msra.mxu0 %v248
    %1176 = vmatprep.subr.mxu0 0.0
    %1177 = vmatpush2.msra.mxu0 %v247
    %1178 = vmatprep.mubr.f32.mxu0 %v595
    %1179 = vmatmul.mubr.f32.gmra.mxu0 %v594
    %v1180 = vpop.f32.mrf.mxu0
    %v1181 = vadd.f32 %v1111, %v1180
    %v1182 = vpop.f32.mrf.mxu0
    %1183 = vdwg.mxu0
    %1184 = vmatprep.subr.mxu0 0.0
    %1185 = vmatpush1.msra.mxu0 %v278
    %1186 = vmatprep.subr.mxu0 0.0
    %1187 = vmatpush1.msra.mxu0 %v277
    %1188 = vmatprep.subr.mxu0 0.0
    %1189 = vmatpush1.msra.mxu0 %v276
    %1190 = vmatprep.subr.mxu0 0.0
    %1191 = vmatpush1.msra.mxu0 %v275
    %1192 = vmatprep.subr.mxu0 0.0
    %1193 = vmatpush1.msra.mxu0 %v274
    %1194 = vmatprep.subr.mxu0 0.0
    %1195 = vmatpush1.msra.mxu0 %v273
    %1196 = vmatprep.subr.mxu0 0.0
    %1197 = vmatpush1.msra.mxu0 %v272
    %1198 = vmatprep.subr.mxu0 0.0
    %1199 = vmatpush1.msra.mxu0 %v271
    %1200 = vmatprep.subr.mxu0 0.0
    %1201 = vmatpush1.msra.mxu0 %v270
    %1202 = vmatprep.subr.mxu0 0.0
    %1203 = vmatpush1.msra.mxu0 %v269
    %1204 = vmatprep.subr.mxu0 0.0
    %1205 = vmatpush1.msra.mxu0 %v268
    %1206 = vmatprep.subr.mxu0 0.0
    %1207 = vmatpush1.msra.mxu0 %v267
    %1208 = vmatprep.subr.mxu0 0.0
    %1209 = vmatpush1.msra.mxu0 %v266
    %1210 = vmatprep.subr.mxu0 0.0
    %1211 = vmatpush1.msra.mxu0 %v265
    %1212 = vmatprep.subr.mxu0 0.0
    %1213 = vmatpush1.msra.mxu0 %v264
    %1214 = vmatprep.subr.mxu0 0.0
    %1215 = vmatpush1.msra.mxu0 %v263
    %1216 = vmatprep.subr.mxu0 0.0
    %1217 = vmatpush2.msra.mxu0 %v294
    %1218 = vmatprep.subr.mxu0 0.0
    %1219 = vmatpush2.msra.mxu0 %v293
    %1220 = vmatprep.subr.mxu0 0.0
    %1221 = vmatpush2.msra.mxu0 %v292
    %1222 = vmatprep.subr.mxu0 0.0
    %1223 = vmatpush2.msra.mxu0 %v291
    %1224 = vmatprep.subr.mxu0 0.0
    %1225 = vmatpush2.msra.mxu0 %v290
    %1226 = vmatprep.subr.mxu0 0.0
    %1227 = vmatpush2.msra.mxu0 %v289
    %1228 = vmatprep.subr.mxu0 0.0
    %1229 = vmatpush2.msra.mxu0 %v288
    %1230 = vmatprep.subr.mxu0 0.0
    %1231 = vmatpush2.msra.mxu0 %v287
    %1232 = vmatprep.subr.mxu0 0.0
    %1233 = vmatpush2.msra.mxu0 %v286
    %1234 = vmatprep.subr.mxu0 0.0
    %1235 = vmatpush2.msra.mxu0 %v285
    %1236 = vmatprep.subr.mxu0 0.0
    %1237 = vmatpush2.msra.mxu0 %v284
    %1238 = vmatprep.subr.mxu0 0.0
    %1239 = vmatpush2.msra.mxu0 %v283
    %1240 = vmatprep.subr.mxu0 0.0
    %1241 = vmatpush2.msra.mxu0 %v282
    %1242 = vmatprep.subr.mxu0 0.0
    %1243 = vmatpush2.msra.mxu0 %v281
    %1244 = vmatprep.subr.mxu0 0.0
    %1245 = vmatpush2.msra.mxu0 %v280
    %1246 = vmatprep.subr.mxu0 0.0
    %1247 = vmatpush2.msra.mxu0 %v279
    %1248 = vmatprep.mubr.f32.mxu0 %v597
    %1249 = vmatmul.mubr.f32.gmra.mxu0 %v596
    %v1250 = vpop.f32.mrf.mxu0
    %v1251 = vadd.f32 %v1181, %v1250
    %v1252 = vpop.f32.mrf.mxu0
    %1253 = vdwg.mxu0
    %1254 = vmatprep.subr.mxu0 0.0
    %1255 = vmatpush1.msra.mxu0 %v310
    %1256 = vmatprep.subr.mxu0 0.0
    %1257 = vmatpush1.msra.mxu0 %v309
    %1258 = vmatprep.subr.mxu0 0.0
    %1259 = vmatpush1.msra.mxu0 %v308
    %1260 = vmatprep.subr.mxu0 0.0
    %1261 = vmatpush1.msra.mxu0 %v307
    %1262 = vmatprep.subr.mxu0 0.0
    %1263 = vmatpush1.msra.mxu0 %v306
    %1264 = vmatprep.subr.mxu0 0.0
    %1265 = vmatpush1.msra.mxu0 %v305
    %1266 = vmatprep.subr.mxu0 0.0
    %1267 = vmatpush1.msra.mxu0 %v304
    %1268 = vmatprep.subr.mxu0 0.0
    %1269 = vmatpush1.msra.mxu0 %v303
    %1270 = vmatprep.subr.mxu0 0.0
    %1271 = vmatpush1.msra.mxu0 %v302
    %1272 = vmatprep.subr.mxu0 0.0
    %1273 = vmatpush1.msra.mxu0 %v301
    %1274 = vmatprep.subr.mxu0 0.0
    %1275 = vmatpush1.msra.mxu0 %v300
    %1276 = vmatprep.subr.mxu0 0.0
    %1277 = vmatpush1.msra.mxu0 %v299
    %1278 = vmatprep.subr.mxu0 0.0
    %1279 = vmatpush1.msra.mxu0 %v298
    %1280 = vmatprep.subr.mxu0 0.0
    %1281 = vmatpush1.msra.mxu0 %v297
    %1282 = vmatprep.subr.mxu0 0.0
    %1283 = vmatpush1.msra.mxu0 %v296
    %1284 = vmatprep.subr.mxu0 0.0
    %1285 = vmatpush1.msra.mxu0 %v295
    %1286 = vmatprep.subr.mxu0 0.0
    %1287 = vmatpush2.msra.mxu0 %v326
    %1288 = vmatprep.subr.mxu0 0.0
    %1289 = vmatpush2.msra.mxu0 %v325
    %1290 = vmatprep.subr.mxu0 0.0
    %1291 = vmatpush2.msra.mxu0 %v324
    %1292 = vmatprep.subr.mxu0 0.0
    %1293 = vmatpush2.msra.mxu0 %v323
    %1294 = vmatprep.subr.mxu0 0.0
    %1295 = vmatpush2.msra.mxu0 %v322
    %1296 = vmatprep.subr.mxu0 0.0
    %1297 = vmatpush2.msra.mxu0 %v321
    %1298 = vmatprep.subr.mxu0 0.0
    %1299 = vmatpush2.msra.mxu0 %v320
    %1300 = vmatprep.subr.mxu0 0.0
    %1301 = vmatpush2.msra.mxu0 %v319
    %1302 = vmatprep.subr.mxu0 0.0
    %1303 = vmatpush2.msra.mxu0 %v318
    %1304 = vmatprep.subr.mxu0 0.0
    %1305 = vmatpush2.msra.mxu0 %v317
    %1306 = vmatprep.subr.mxu0 0.0
    %1307 = vmatpush2.msra.mxu0 %v316
    %1308 = vmatprep.subr.mxu0 0.0
    %1309 = vmatpush2.msra.mxu0 %v315
    %1310 = vmatprep.subr.mxu0 0.0
    %1311 = vmatpush2.msra.mxu0 %v314
    %1312 = vmatprep.subr.mxu0 0.0
    %1313 = vmatpush2.msra.mxu0 %v313
    %1314 = vmatprep.subr.mxu0 0.0
    %1315 = vmatpush2.msra.mxu0 %v312
    %1316 = vmatprep.subr.mxu0 0.0
    %1317 = vmatpush2.msra.mxu0 %v311
    %1318 = vmatprep.mubr.f32.mxu0 %v631
    %1319 = vmatmul.mubr.f32.gmra.mxu0 %v630
    %v1320 = vpop.f32.mrf.mxu0
    %v1321 = vadd.f32 %v1251, %v1320
    %v1322 = vpop.f32.mrf.mxu0
    %1323 = vdwg.mxu0
    %1324 = vmatprep.subr.mxu0 0.0
    %1325 = vmatpush1.msra.mxu0 %v342
    %1326 = vmatprep.subr.mxu0 0.0
    %1327 = vmatpush1.msra.mxu0 %v341
    %1328 = vmatprep.subr.mxu0 0.0
    %1329 = vmatpush1.msra.mxu0 %v340
    %1330 = vmatprep.subr.mxu0 0.0
    %1331 = vmatpush1.msra.mxu0 %v339
    %1332 = vmatprep.subr.mxu0 0.0
    %1333 = vmatpush1.msra.mxu0 %v338
    %1334 = vmatprep.subr.mxu0 0.0
    %1335 = vmatpush1.msra.mxu0 %v337
    %1336 = vmatprep.subr.mxu0 0.0
    %1337 = vmatpush1.msra.mxu0 %v336
    %1338 = vmatprep.subr.mxu0 0.0
    %1339 = vmatpush1.msra.mxu0 %v335
    %1340 = vmatprep.subr.mxu0 0.0
    %1341 = vmatpush1.msra.mxu0 %v334
    %1342 = vmatprep.subr.mxu0 0.0
    %1343 = vmatpush1.msra.mxu0 %v333
    %1344 = vmatprep.subr.mxu0 0.0
    %1345 = vmatpush1.msra.mxu0 %v332
    %1346 = vmatprep.subr.mxu0 0.0
    %1347 = vmatpush1.msra.mxu0 %v331
    %1348 = vmatprep.subr.mxu0 0.0
    %1349 = vmatpush1.msra.mxu0 %v330
    %1350 = vmatprep.subr.mxu0 0.0
    %1351 = vmatpush1.msra.mxu0 %v329
    %1352 = vmatprep.subr.mxu0 0.0
    %1353 = vmatpush1.msra.mxu0 %v328
    %1354 = vmatprep.subr.mxu0 0.0
    %1355 = vmatpush1.msra.mxu0 %v327
    %1356 = vmatprep.subr.mxu0 0.0
    %1357 = vmatpush2.msra.mxu0 %v358
    %1358 = vmatprep.subr.mxu0 0.0
    %1359 = vmatpush2.msra.mxu0 %v357
    %1360 = vmatprep.subr.mxu0 0.0
    %1361 = vmatpush2.msra.mxu0 %v356
    %1362 = vmatprep.subr.mxu0 0.0
    %1363 = vmatpush2.msra.mxu0 %v355
    %1364 = vmatprep.subr.mxu0 0.0
    %1365 = vmatpush2.msra.mxu0 %v354
    %1366 = vmatprep.subr.mxu0 0.0
    %1367 = vmatpush2.msra.mxu0 %v353
    %1368 = vmatprep.subr.mxu0 0.0
    %1369 = vmatpush2.msra.mxu0 %v352
    %1370 = vmatprep.subr.mxu0 0.0
    %1371 = vmatpush2.msra.mxu0 %v351
    %1372 = vmatprep.subr.mxu0 0.0
    %1373 = vmatpush2.msra.mxu0 %v350
    %1374 = vmatprep.subr.mxu0 0.0
    %1375 = vmatpush2.msra.mxu0 %v349
    %1376 = vmatprep.subr.mxu0 0.0
    %1377 = vmatpush2.msra.mxu0 %v348
    %1378 = vmatprep.subr.mxu0 0.0
    %1379 = vmatpush2.msra.mxu0 %v347
    %1380 = vmatprep.subr.mxu0 0.0
    %1381 = vmatpush2.msra.mxu0 %v346
    %1382 = vmatprep.subr.mxu0 0.0
    %1383 = vmatpush2.msra.mxu0 %v345
    %1384 = vmatprep.subr.mxu0 0.0
    %1385 = vmatpush2.msra.mxu0 %v344
    %1386 = vmatprep.subr.mxu0 0.0
    %1387 = vmatpush2.msra.mxu0 %v343
    %1388 = vmatprep.mubr.f32.mxu0 %v633
    %1389 = vmatmul.mubr.f32.gmra.mxu0 %v632
    %v1390 = vpop.f32.mrf.mxu0
    %v1391 = vadd.f32 %v1321, %v1390
    %v1392 = vpop.f32.mrf.mxu0
    %1393 = vdwg.mxu0
    %1394 = vmatprep.subr.mxu0 0.0
    %1395 = vmatpush1.msra.mxu0 %v374
    %1396 = vmatprep.subr.mxu0 0.0
    %1397 = vmatpush1.msra.mxu0 %v373
    %1398 = vmatprep.subr.mxu0 0.0
    %1399 = vmatpush1.msra.mxu0 %v372
    %1400 = vmatprep.subr.mxu0 0.0
    %1401 = vmatpush1.msra.mxu0 %v371
    %1402 = vmatprep.subr.mxu0 0.0
    %1403 = vmatpush1.msra.mxu0 %v370
    %1404 = vmatprep.subr.mxu0 0.0
    %1405 = vmatpush1.msra.mxu0 %v369
    %1406 = vmatprep.subr.mxu0 0.0
    %1407 = vmatpush1.msra.mxu0 %v368
    %1408 = vmatprep.subr.mxu0 0.0
    %1409 = vmatpush1.msra.mxu0 %v367
    %1410 = vmatprep.subr.mxu0 0.0
    %1411 = vmatpush1.msra.mxu0 %v366
    %1412 = vmatprep.subr.mxu0 0.0
    %1413 = vmatpush1.msra.mxu0 %v365
    %1414 = vmatprep.subr.mxu0 0.0
    %1415 = vmatpush1.msra.mxu0 %v364
    %1416 = vmatprep.subr.mxu0 0.0
    %1417 = vmatpush1.msra.mxu0 %v363
    %1418 = vmatprep.subr.mxu0 0.0
    %1419 = vmatpush1.msra.mxu0 %v362
    %1420 = vmatprep.subr.mxu0 0.0
    %1421 = vmatpush1.msra.mxu0 %v361
    %1422 = vmatprep.subr.mxu0 0.0
    %1423 = vmatpush1.msra.mxu0 %v360
    %1424 = vmatprep.subr.mxu0 0.0
    %1425 = vmatpush1.msra.mxu0 %v359
    %1426 = vmatprep.subr.mxu0 0.0
    %1427 = vmatpush2.msra.mxu0 %v390
    %1428 = vmatprep.subr.mxu0 0.0
    %1429 = vmatpush2.msra.mxu0 %v389
    %1430 = vmatprep.subr.mxu0 0.0
    %1431 = vmatpush2.msra.mxu0 %v388
    %1432 = vmatprep.subr.mxu0 0.0
    %1433 = vmatpush2.msra.mxu0 %v387
    %1434 = vmatprep.subr.mxu0 0.0
    %1435 = vmatpush2.msra.mxu0 %v386
    %1436 = vmatprep.subr.mxu0 0.0
    %1437 = vmatpush2.msra.mxu0 %v385
    %1438 = vmatprep.subr.mxu0 0.0
    %1439 = vmatpush2.msra.mxu0 %v384
    %1440 = vmatprep.subr.mxu0 0.0
    %1441 = vmatpush2.msra.mxu0 %v383
    %1442 = vmatprep.subr.mxu0 0.0
    %1443 = vmatpush2.msra.mxu0 %v382
    %1444 = vmatprep.subr.mxu0 0.0
    %1445 = vmatpush2.msra.mxu0 %v381
    %1446 = vmatprep.subr.mxu0 0.0
    %1447 = vmatpush2.msra.mxu0 %v380
    %1448 = vmatprep.subr.mxu0 0.0
    %1449 = vmatpush2.msra.mxu0 %v379
    %1450 = vmatprep.subr.mxu0 0.0
    %1451 = vmatpush2.msra.mxu0 %v378
    %1452 = vmatprep.subr.mxu0 0.0
    %1453 = vmatpush2.msra.mxu0 %v377
    %1454 = vmatprep.subr.mxu0 0.0
    %1455 = vmatpush2.msra.mxu0 %v376
    %1456 = vmatprep.subr.mxu0 0.0
    %1457 = vmatpush2.msra.mxu0 %v375
    %1458 = vmatprep.mubr.f32.mxu0 %v667
    %1459 = vmatmul.mubr.f32.gmra.mxu0 %v666
    %v1460 = vpop.f32.mrf.mxu0
    %v1461 = vadd.f32 %v1391, %v1460
    %v1462 = vpop.f32.mrf.mxu0
    %1463 = vdwg.mxu0
    %1464 = vmatprep.subr.mxu0 0.0
    %1465 = vmatpush1.msra.mxu0 %v406
    %1466 = vmatprep.subr.mxu0 0.0
    %1467 = vmatpush1.msra.mxu0 %v405
    %1468 = vmatprep.subr.mxu0 0.0
    %1469 = vmatpush1.msra.mxu0 %v404
    %1470 = vmatprep.subr.mxu0 0.0
    %1471 = vmatpush1.msra.mxu0 %v403
    %1472 = vmatprep.subr.mxu0 0.0
    %1473 = vmatpush1.msra.mxu0 %v402
    %1474 = vmatprep.subr.mxu0 0.0
    %1475 = vmatpush1.msra.mxu0 %v401
    %1476 = vmatprep.subr.mxu0 0.0
    %1477 = vmatpush1.msra.mxu0 %v400
    %1478 = vmatprep.subr.mxu0 0.0
    %1479 = vmatpush1.msra.mxu0 %v399
    %1480 = vmatprep.subr.mxu0 0.0
    %1481 = vmatpush1.msra.mxu0 %v398
    %1482 = vmatprep.subr.mxu0 0.0
    %1483 = vmatpush1.msra.mxu0 %v397
    %1484 = vmatprep.subr.mxu0 0.0
    %1485 = vmatpush1.msra.mxu0 %v396
    %1486 = vmatprep.subr.mxu0 0.0
    %1487 = vmatpush1.msra.mxu0 %v395
    %1488 = vmatprep.subr.mxu0 0.0
    %1489 = vmatpush1.msra.mxu0 %v394
    %1490 = vmatprep.subr.mxu0 0.0
    %1491 = vmatpush1.msra.mxu0 %v393
    %1492 = vmatprep.subr.mxu0 0.0
    %1493 = vmatpush1.msra.mxu0 %v392
    %1494 = vmatprep.subr.mxu0 0.0
    %1495 = vmatpush1.msra.mxu0 %v391
    %1496 = vmatprep.subr.mxu0 0.0
    %1497 = vmatpush2.msra.mxu0 %v422
    %1498 = vmatprep.subr.mxu0 0.0
    %1499 = vmatpush2.msra.mxu0 %v421
    %1500 = vmatprep.subr.mxu0 0.0
    %1501 = vmatpush2.msra.mxu0 %v420
    %1502 = vmatprep.subr.mxu0 0.0
    %1503 = vmatpush2.msra.mxu0 %v419
    %1504 = vmatprep.subr.mxu0 0.0
    %1505 = vmatpush2.msra.mxu0 %v418
    %1506 = vmatprep.subr.mxu0 0.0
    %1507 = vmatpush2.msra.mxu0 %v417
    %1508 = vmatprep.subr.mxu0 0.0
    %1509 = vmatpush2.msra.mxu0 %v416
    %1510 = vmatprep.subr.mxu0 0.0
    %1511 = vmatpush2.msra.mxu0 %v415
    %1512 = vmatprep.subr.mxu0 0.0
    %1513 = vmatpush2.msra.mxu0 %v414
    %1514 = vmatprep.subr.mxu0 0.0
    %1515 = vmatpush2.msra.mxu0 %v413
    %1516 = vmatprep.subr.mxu0 0.0
    %1517 = vmatpush2.msra.mxu0 %v412
    %1518 = vmatprep.subr.mxu0 0.0
    %1519 = vmatpush2.msra.mxu0 %v411
    %1520 = vmatprep.subr.mxu0 0.0
    %1521 = vmatpush2.msra.mxu0 %v410
    %1522 = vmatprep.subr.mxu0 0.0
    %1523 = vmatpush2.msra.mxu0 %v409
    %1524 = vmatprep.subr.mxu0 0.0
    %1525 = vmatpush2.msra.mxu0 %v408
    %1526 = vmatprep.subr.mxu0 0.0
    %1527 = vmatpush2.msra.mxu0 %v407
    %1528 = vmatprep.mubr.f32.mxu0 %v669
    %1529 = vmatmul.mubr.f32.gmra.mxu0 %v668
    %v1530 = vpop.f32.mrf.mxu0
    %v1531 = vadd.f32 %v1461, %v1530
    %v1532 = vpop.f32.mrf.mxu0
    %1533 = vdwg.mxu0
    %v1534 = vmax.f32 %v1531, 0.0
    %vm1535 = vcmask 80896
    %1536 = vst.msk [vmem:[#allocation2] sm:$0xff] %vm1535, %v1534
    // Predicated region
    $region14: #{_lazynet_pallas.1} parent=1 // pred_check
      _
    $region15: #{_lazynet_pallas.1} parent=1 // pred_check_branch
      %1538 = sbr.rel (0) target = $region17
    $region16: #{_lazynet_pallas.1} parent=1 // pred_region
      %s1540 = ssub.s32 128, 32
      %1541 = vsyncadd [#allocation3], %s1540
      %s1542 = sshll.u32 [#allocation2], 4
      %s1543 = int_to_ptr.vmem [resolvable:$true] %s1542
      %1548 = dma.vmem_to_hbm [thread:$0]  %s1543, 32, %s3, [#allocation3], 32, 32, 2
    $region17: #{_lazynet_pallas.1} parent=1 // pred_fallthru
      _
    // Predicated region
    $region18: #{_lazynet_pallas.1} parent=1 // pred_check
      _
    $region19: #{_lazynet_pallas.1} parent=1 // pred_check_branch
      %1550 = sbr.rel (0) target = $region21
    $region20: #{_lazynet_pallas.1} parent=1 // pred_region
      %1551 = dma.done [#allocation3], 128
    $region21: #{_lazynet_pallas.1} parent=1 // pred_fallthru
      _
    %1552 = vsyncpa [#allocation3], 1

</llo_original>
